<compile_context>
chip_gen: v7x
topology: tpu7x:2x2x1
jax: 0.10.0
libtpu: 0.0.40
codegen_flags: <defaults>
</compile_context>

<pallas_src>
import jax
import jax.numpy as jnp
import numpy as np
from jax import lax
from jax.experimental import pallas as pl
from jax.experimental.pallas import tpu as pltpu

# ---------------- small synthetic config (mirrors the module's structure) ---
B = 2            # batch
S = 8            # sequence length
VOCAB = 100
HIN = 32         # roberta hidden size stand-in (1024 in the real model)
HS = 16          # lstm hidden per direction   (512 in the real model)
C_LSTM = 2 * HS  # bilstm output channels      (1024 in the real model)
COUT = 8         # conv out channels           (512 in the real model)
KSIZES = (3, 5, 7)
KW = max(KSIZES)
PMAX = (KW - 1) // 2
L_POOL = S // 2
FC_IN = COUT * len(KSIZES) * L_POOL
FC_HID = 16      # 256 in the real model

assert S % 2 == 0, "MaxPool1d(2) assumes even sequence length"
assert all(k % 2 == 1 for k in KSIZES), "'same' padding assumes odd kernel sizes"

VMEM_SPEC = pl.BlockSpec(memory_space=pltpu.MemorySpace.VMEM)


def _vmem_limit_bytes():
    # Per-generation limit instead of a hard-coded 48 MiB: leave headroom for
    # compiler scratch / pipeline buffers, cap on big-VMEM generations.
    cap = 64 * 1024 * 1024  # conservative fallback (v7x per-TC physical VMEM)
    try:
        info = pltpu.get_tpu_info()
        cap = int(getattr(info, "vmem_capacity_bytes", cap))
    except Exception:
        pass
    return max(32 * 1024 * 1024, min(cap - 16 * 1024 * 1024, 100 * 1024 * 1024))


COMPILER_PARAMS = pltpu.CompilerParams(vmem_limit_bytes=_vmem_limit_bytes())


# =============================== BiLSTM kernel ===============================
def bilstm_kernel(x_ref, wih_ref, whh_ref, b_ref, out_ref, gates_ref):
    # x_ref:     [L*B, HIN]   bf16  time-major rows (t*B + b)
    # wih_ref:   [HIN, 8*HS]  bf16  [fwd i f g o | bwd i f g o] input weights
    # whh_ref:   [2*HS, 8*HS] bf16  block-diag(whh_f, whh_b)
    # b_ref:     [1, 8*HS]    f32   pre-summed b_ih+b_hh, fwd|bwd packed
    # out_ref:   [L, B, 2*HS] bf16  lane halves [fwd | bwd]
    # gates_ref: [L, B, 8*HS] bf16  hoisted input-projection gates (scratch)
    L, Bb, two_hs = out_ref.shape
    hs = two_hs // 2

    # ---- hoisted input projection: ONE MXU matmul for both directions ----
    # TODO(synk): at production (S=512, HIN=1024) chunk this matmul over L and
    # double-buffer so only a small gate window stays VMEM resident.
    gates = jnp.dot(x_ref[...], wih_ref[...],
                    preferred_element_type=jnp.float32) + b_ref[...]
    gates_ref[...] = gates.reshape(L, Bb, 8 * hs).astype(gates_ref.dtype)

    whh = whh_ref[...]

    def gate_math(g, c):
        i = jax.nn.sigmoid(g[:, 0 * hs:1 * hs])
        f = jax.nn.sigmoid(g[:, 1 * hs:2 * hs])
        gg = jnp.tanh(g[:, 2 * hs:3 * hs])
        o = jax.nn.sigmoid(g[:, 3 * hs:4 * hs])
        c_new = f * c + i * gg
        return o * jnp.tanh(c_new), c_new

    def step(t, carry):
        h_f, c_f, h_b, c_b = carry
        tb = L - 1 - t
        # fused fwd+bwd recurrent matmul: [B, 2HS] x block-diag [2HS, 8HS]
        h_cat = jnp.concatenate([h_f, h_b], axis=-1).astype(jnp.bfloat16)
        g_rec = jnp.dot(h_cat, whh, preferred_element_type=jnp.float32)
        g_f = gates_ref[t, :, :4 * hs].astype(jnp.float32) + g_rec[:, :4 * hs]
        g_b = gates_ref[tb, :, 4 * hs:].astype(jnp.float32) + g_rec[:, 4 * hs:]
        h_f, c_f = gate_math(g_f, c_f)
        h_b, c_b = gate_math(g_b, c_b)
        # write recurrence outputs straight into the output lane halves
        out_ref[t, :, :hs] = h_f.astype(out_ref.dtype)
        out_ref[tb, :, hs:] = h_b.astype(out_ref.dtype)
        return (h_f, c_f, h_b, c_b)

    z = jnp.zeros((Bb, hs), jnp.float32)
    lax.fori_loop(0, L, step, (z, z, z, z), unroll=min(8, L))


def bilstm_pallas(x2d, wih_all, whh_blk, b_all, *, seq_len, batch):
    hs = whh_blk.shape[0] // 2
    # TODO(synk): at production add a batch-tile grid axis with
    # dimension_semantics=("parallel",) so v7x's 2 TensorCores split the work.
    return pl.pallas_call(
        bilstm_kernel,
        out_shape=jax.ShapeDtypeStruct((seq_len, batch, 2 * hs), jnp.bfloat16),
        in_specs=[VMEM_SPEC] * 4,
        out_specs=VMEM_SPEC,
        scratch_shapes=[pltpu.VMEM((seq_len, batch, 8 * hs), jnp.bfloat16)],
        compiler_params=COMPILER_PARAMS,
    )(x2d, wih_all, whh_blk, b_all)


# ========= fused Conv1d(x3) + ReLU + MaxPool1d(2) + fc + fc2 + sigmoid =======
def conv_head_kernel(x_ref, wc3_ref, wc5_ref, wc7_ref, bconv_ref,
                     w1_ref, b1_ref, w2_ref, b2_ref, out_ref, pool_ref):
    # x_ref:    [L, B, C]             bf16 (time-major, channels-last)
    # wc{k}:    [k, C, COUT]          bf16 per-branch conv weights (true taps)
    # bconv:    [1, 3*COUT]           f32
    # w1_ref:   [LP, 3*COUT, FC_HID]  bf16 (torch flatten order pre-folded)
    # pool_ref: [LP, B, 3*COUT]       bf16 scratch
    # out_ref:  [B, 1]                f32
    L, Bb, C = x_ref.shape
    LP, _, fc_hid = w1_ref.shape
    w_branches = (wc3_ref, wc5_ref, wc7_ref)
    kmax = max(w.shape[0] for w in w_branches)
    pmax = (kmax - 1) // 2

    # ---- in-kernel 'same' padding (max window) along time, flatten rows once
    x = x_ref[...]
    zpad = jnp.zeros((pmax, Bb, C), x.dtype)
    xp = jnp.concatenate([zpad, x, zpad], axis=0)            # [L+2*pmax, B, C]
    xp2 = xp.reshape((L + 2 * pmax) * Bb, C)                 # rows (t, b)

    # ---- per-tap accumulation (no KW*C im2col slab), per-branch true taps ---
    accs = []
    for w_ref in w_branches:
        k = w_ref.shape[0]
        pad = (k - 1) // 2
        acc_b = jnp.zeros((L * Bb, w_ref.shape[2]), jnp.float32)
        for kk in range(k):                                  # small static unroll
            j = kk + pmax - pad
            acc_b = acc_b + jnp.dot(xp2[j * Bb:j * Bb + L * Bb, :], w_ref[kk],
                                    preferred_element_type=jnp.float32)
        accs.append(acc_b)
    acc = jnp.concatenate(accs, axis=-1)                     # [L*B, 3*COUT]
    acc = jnp.maximum(acc + bconv_ref[...], 0.0)             # bias + ReLU
    n3 = acc.shape[-1]
    pool_ref[...] = jnp.max(acc.reshape(LP, 2, Bb, n3),      # MaxPool1d(2)
                            axis=1).astype(pool_ref.dtype)

    # ---- fc -> fc2 -> sigmoid head (dropout = identity at inference) ----
    # TODO(synk): at production stream w1_ref over an LP grid axis via
    # BlockSpec (192 MiB bf16 cannot be VMEM resident); fori body is unchanged.
    def fc_step(p, h):
        return h + jnp.dot(pool_ref[p], w1_ref[p],
                           preferred_element_type=jnp.float32)

    h = lax.fori_loop(0, LP, fc_step,
                      jnp.zeros((Bb, fc_hid), jnp.float32), unroll=True)
    h = h + b1_ref[...]
    y = jnp.dot(h.astype(jnp.bfloat16), w2_ref[...],
                preferred_element_type=jnp.float32) + b2_ref[...]
    out_ref[...] = jax.nn.sigmoid(y)


def conv_head_pallas(lstm_tm, wc3, wc5, wc7, bconv, w1_3d, b1, w2, b2):
    _, Bb, _ = lstm_tm.shape
    LP, n3, _ = w1_3d.shape
    # TODO(synk): at production add a parallel batch grid (v7x 2 TCs) here too.
    return pl.pallas_call(
        conv_head_kernel,
        out_shape=jax.ShapeDtypeStruct((Bb, 1), jnp.float32),
        in_specs=[VMEM_SPEC] * 9,
        out_specs=VMEM_SPEC,
        scratch_shapes=[pltpu.VMEM((LP, Bb, n3), jnp.bfloat16)],
        compiler_params=COMPILER_PARAMS,
    )(lstm_tm, wc3, wc5, wc7, bconv, w1_3d, b1, w2, b2)


# ================================ parameters =================================
def init_params(key):
    ks = jax.random.split(key, 20)

    def rnd(k, shape, s=0.1):
        return jax.random.normal(k, shape, jnp.float32) * s

    # ---- f32 "master" parameters (used by the pure-JAX reference) ----
    p = {}
    p['emb'] = rnd(ks[0], (VOCAB, HIN), 1.0)
    p['wih_f'] = rnd(ks[1], (HIN, 4 * HS))
    p['whh_f'] = rnd(ks[2], (HS, 4 * HS))
    p['b_f'] = rnd(ks[3], (1, 4 * HS))                 # b_ih + b_hh pre-summed
    p['wih_b'] = rnd(ks[4], (HIN, 4 * HS))
    p['whh_b'] = rnd(ks[5], (HS, 4 * HS))
    p['b_b'] = rnd(ks[6], (1, 4 * HS))
    p['convw'], p['convb'] = [], []
    for i, Ksz in enumerate(KSIZES):
        p['convw'].append(rnd(ks[7 + i], (Ksz, C_LSTM, COUT)))   # [K, Cin, Cout]
        p['convb'].append(rnd(ks[10 + i], (1, COUT)))
    p['w1'] = rnd(ks[13], (FC_IN, FC_HID))             # rows in torch flatten order
    p['b1'] = rnd(ks[14], (1, FC_HID))
    p['w2'] = rnd(ks[15], (FC_HID, 1))
    p['b2'] = jnp.zeros((1, 1), jnp.float32)

    # ---- packed / bf16 kernel parameters ----
    bf16 = jnp.bfloat16
    k = {'emb': p['emb']}
    # fwd|bwd input weights packed; biases packed host-side (no in-kernel concat)
    k['wih_all'] = jnp.concatenate([p['wih_f'], p['wih_b']], axis=1).astype(bf16)
    k['b_all'] = jnp.concatenate([p['b_f'], p['b_b']], axis=1)
    # block-diagonal recurrent weights -> ONE fused per-step matmul
    whh_blk = np.zeros((2 * HS, 8 * HS), np.float32)
    whh_blk[:HS, :4 * HS] = np.asarray(p['whh_f'])
    whh_blk[HS:, 4 * HS:] = np.asarray(p['whh_b'])
    k['whh_blk'] = jnp.asarray(whh_blk).astype(bf16)
    # per-branch conv weights with their true tap counts (no zero-padded taps)
    k['wc'] = [w.astype(bf16) for w in p['convw']]
    k['bconv'] = jnp.concatenate(p['convb'], axis=1)   # [1, 3*COUT] f32
    # Fold the torch cat(dim=1).view(B,-1) flatten order (index = ch*LP + pos)
    # into the fc weight: w1_3d[pos, ch, :] = w1[ch*LP + pos, :].
    k['w1_3d'] = jnp.transpose(
        p['w1'].reshape(len(KSIZES) * COUT, L_POOL, FC_HID), (1, 0, 2)).astype(bf16)
    k['b1'] = p['b1']
    k['w2'] = p['w2'].astype(bf16)
    k['b2'] = p['b2']
    return p, k


# ============================= full forward pass =============================
def model_forward(input_ids, attention_mask, kp):
    # TODO(synk): the pretrained RoBERTa-large encoder (AutoModel) is not
    # reimplemented; a deterministic embedding table stands in for its
    # `last_hidden_state`, so `attention_mask` (only used inside RoBERTa) is
    # unused here.
    del attention_mask
    Bb, seq = input_ids.shape
    last_hidden = kp['emb'][input_ids]                              # [B, S, HIN]

    # time-major + flattened rows for the hoisted LSTM input projection (bf16)
    x2d = jnp.transpose(last_hidden, (1, 0, 2)).reshape(seq * Bb, HIN)
    x2d = x2d.astype(jnp.bfloat16)

    lstm_tm = bilstm_pallas(x2d, kp['wih_all'], kp['whh_blk'], kp['b_all'],
                            seq_len=seq, batch=Bb)                  # [S, B, 2*HS] bf16

    y = conv_head_pallas(lstm_tm, kp['wc'][0], kp['wc'][1], kp['wc'][2],
                         kp['bconv'], kp['w1_3d'], kp['b1'],
                         kp['w2'], kp['b2'])                        # [B, 1]
    return y[:, 0]                                                  # squeeze(1)


# ======================== pure-JAX reference (sanity) ========================
# Mirrors the kernels' quantization points (bf16 MXU operands, bf16 gate slab,
# bf16 BiLSTM output) so the comparison isolates the Pallas implementation;
# gate math / state / accumulation stay f32.
def reference_forward(input_ids, p):
    bf16 = jnp.bfloat16
    x = p['emb'][input_ids]                                  # [B, S, HIN] f32
    xs = jnp.transpose(x, (1, 0, 2)).astype(bf16)            # [S, B, HIN]

    def lstm_dir(wih, whh, b, reverse):
        wih_c, whh_c = wih.astype(bf16), whh.astype(bf16)
        # mirrors the kernel's hoisted projection stored as a bf16 gate slab
        gx = (jnp.einsum('sbh,hg->sbg', xs, wih_c,
                         preferred_element_type=jnp.float32) + b).astype(bf16)

        def step(carry, gx_t):
            h, c = carry
            g = gx_t.astype(jnp.float32) + jnp.dot(
                h.astype(bf16), whh_c, preferred_element_type=jnp.float32)
            i = jax.nn.sigmoid(g[:, :HS])
            f = jax.nn.sigmoid(g[:, HS:2 * HS])
            gg = jnp.tanh(g[:, 2 * HS:3 * HS])
            o = jax.nn.sigmoid(g[:, 3 * HS:])
            c = f * c + i * gg
            h = o * jnp.tanh(c)
            return (h, c), h

        init = (jnp.zeros((xs.shape[1], HS), jnp.float32),
                jnp.zeros((xs.shape[1], HS), jnp.float32))
        _, hseq = lax.scan(step, init, gx, reverse=reverse)
        return hseq

    hf = lstm_dir(p['wih_f'], p['whh_f'], p['b_f'], False)
    hb = lstm_dir(p['wih_b'], p['whh_b'], p['b_b'], True)
    lstm_out = jnp.concatenate([hf, hb], axis=-1).astype(bf16)   # [S, B, 2*HS]
    x_blc = jnp.transpose(lstm_out, (1, 0, 2))                   # [B, S, C]

    feats = []
    Bb, L, _ = x_blc.shape
    for i, Ksz in enumerate(KSIZES):
        pad = (Ksz - 1) // 2
        xp = jnp.pad(x_blc, ((0, 0), (pad, pad), (0, 0)))
        w = p['convw'][i].astype(bf16)                       # [K, Cin, Cout]
        acc = jnp.zeros((Bb, L, COUT), jnp.float32)
        for kk in range(Ksz):
            acc = acc + jnp.einsum('blc,co->blo', xp[:, kk:kk + L, :], w[kk],
                                   preferred_element_type=jnp.float32)
        acc = jnp.maximum(acc + p['convb'][i], 0.0)
        pooled = jnp.max(acc.reshape(Bb, L // 2, 2, COUT), axis=2)  # [B, LP, Cout]
        feats.append(jnp.transpose(pooled, (0, 2, 1)))              # [B, Cout, LP]
    cat = jnp.concatenate(feats, axis=1)                            # [B, 3*Cout, LP]
    flat = cat.reshape(Bb, -1)                                      # torch .view order
    h = jnp.dot(flat.astype(bf16), p['w1'].astype(bf16),
                preferred_element_type=jnp.float32) + p['b1']
    y = jnp.dot(h.astype(bf16), p['w2'].astype(bf16),
                preferred_element_type=jnp.float32) + p['b2']
    return jax.nn.sigmoid(y)[:, 0]


# ==================================== main ===================================
if __name__ == "__main__":
    key = jax.random.PRNGKey(0)
    pkey, dkey = jax.random.split(key)
    ref_params, kern_params = init_params(pkey)

    input_ids = jax.random.randint(dkey, (B, S), 0, VOCAB, dtype=jnp.int32)
    attention_mask = jnp.ones((B, S), jnp.int32)

    out = jax.block_until_ready(model_forward(input_ids, attention_mask, kern_params))
    ref = jax.block_until_ready(reference_forward(input_ids, ref_params))

    assert out.shape == (B,)
    np.testing.assert_allclose(np.asarray(out, np.float32),
                               np.asarray(ref, np.float32),
                               rtol=5e-3, atol=5e-3)
    print("KERNEL_OK")
</pallas_src>

<mosaic_0001>
module attributes {stable_mosaic.version = 11 : i64} {
  func.func @bilstm_kernel(%arg0: memref<16x32xbf16, #tpu.memory_space<vmem>>, %arg1: memref<32x128xbf16, #tpu.memory_space<vmem>>, %arg2: memref<32x128xbf16, #tpu.memory_space<vmem>>, %arg3: memref<1x128xf32, #tpu.memory_space<vmem>>, %arg4: memref<8x2x32xbf16, #tpu.memory_space<vmem>>, %arg5: memref<8x2x128xbf16, #tpu.memory_space<vmem>>) attributes {dimension_semantics = [], scalar_prefetch = 0 : i64, scratch_operands = 1 : i64, tpu.core_type = #tpu.core_type<tc>} {
    %c0 = arith.constant 0 : index
    %c0_0 = arith.constant 0 : index
    %0 = vector.load %arg0[%c0, %c0_0] : memref<16x32xbf16, #tpu.memory_space<vmem>>, vector<16x32xbf16>
    %c0_1 = arith.constant 0 : index
    %c0_2 = arith.constant 0 : index
    %1 = vector.load %arg1[%c0_1, %c0_2] : memref<32x128xbf16, #tpu.memory_space<vmem>>, vector<32x128xbf16>
    %cst = arith.constant dense<0.000000e+00> : vector<16x128xf32>
    %2 = tpu.matmul %0, %1, %cst {dimension_numbers = #tpu.dot_dimension_numbers<[1], [0], [0], [1], [0, 0, 1, 1], [], []>} : vector<16x32xbf16>, vector<32x128xbf16>, vector<16x128xf32> -> vector<16x128xf32>
    %c0_3 = arith.constant 0 : index
    %c0_4 = arith.constant 0 : index
    %3 = vector.load %arg3[%c0_3, %c0_4] : memref<1x128xf32, #tpu.memory_space<vmem>>, vector<1x128xf32>
    %4 = vector.broadcast %3 : vector<1x128xf32> to vector<16x128xf32>
    %5 = arith.addf %2, %4 : vector<16x128xf32>
    %6 = vector.shape_cast %5 : vector<16x128xf32> to vector<8x2x128xf32>
    %7 = arith.truncf %6 : vector<8x2x128xf32> to vector<8x2x128xbf16>
    %c0_5 = arith.constant 0 : index
    %c0_6 = arith.constant 0 : index
    %c0_7 = arith.constant 0 : index
    %8 = vector.load %arg5[%c0_5, %c0_6, %c0_7] : memref<8x2x128xbf16, #tpu.memory_space<vmem>>, vector<8x2x128xbf16>
    tpu.vector_store %arg5[%c0_5, %c0_6, %c0_7], %7 {strides = array<i32>} : memref<8x2x128xbf16, #tpu.memory_space<vmem>>, vector<8x2x128xbf16>,
    %c0_8 = arith.constant 0 : index
    %c0_9 = arith.constant 0 : index
    %9 = vector.load %arg2[%c0_8, %c0_9] : memref<32x128xbf16, #tpu.memory_space<vmem>>, vector<32x128xbf16>
    %cst_10 = arith.constant 0.000000e+00 : f32
    %10 = vector.broadcast %cst_10 : f32 to vector<2x16xf32>
    %c0_i32 = arith.constant 0 : i32
    %c7_i32 = arith.constant 7 : i32
    %11 = arith.subi %c7_i32, %c0_i32 : i32
    %12 = tpu.concatenate %10, %10 in 1 : vector<2x16xf32>, vector<2x16xf32> -> vector<2x32xf32>
    %13 = arith.truncf %12 : vector<2x32xf32> to vector<2x32xbf16>
    %cst_11 = arith.constant dense<0.000000e+00> : vector<2x128xf32>
    %14 = tpu.matmul %13, %9, %cst_11 {dimension_numbers = #tpu.dot_dimension_numbers<[1], [0], [0], [1], [0, 0, 1, 1], [], []>} : vector<2x32xbf16>, vector<32x128xbf16>, vector<2x128xf32> -> vector<2x128xf32>
    %15 = arith.index_cast %c0_i32 : i32 to index
    %c0_12 = arith.constant 0 : index
    %c0_13 = arith.constant 0 : index
    %16 = vector.load %arg5[%15, %c0_12, %c0_13] : memref<8x2x128xbf16, #tpu.memory_space<vmem>>, vector<1x2x64xbf16>
    %17 = vector.shape_cast %16 : vector<1x2x64xbf16> to vector<2x64xbf16>
    %18 = arith.extf %17 : vector<2x64xbf16> to vector<2x64xf32>
    %19 = vector.extract_strided_slice %14 {offsets = [0, 0], sizes = [2, 64], strides = [1, 1]} : vector<2x128xf32> to vector<2x64xf32>
    %20 = arith.addf %18, %19 : vector<2x64xf32>
    %21 = arith.index_cast %11 : i32 to index
    %c0_14 = arith.constant 0 : index
    %c64 = arith.constant 64 : index
    %22 = vector.load %arg5[%21, %c0_14, %c64] : memref<8x2x128xbf16, #tpu.memory_space<vmem>>, vector<1x2x64xbf16>
    %23 = vector.shape_cast %22 : vector<1x2x64xbf16> to vector<2x64xbf16>
    %24 = arith.extf %23 : vector<2x64xbf16> to vector<2x64xf32>
    %25 = vector.extract_strided_slice %14 {offsets = [0, 64], sizes = [2, 64], strides = [1, 1]} : vector<2x128xf32> to vector<2x64xf32>
    %26 = arith.addf %24, %25 : vector<2x64xf32>
    %27 = vector.extract_strided_slice %20 {offsets = [0, 0], sizes = [2, 16], strides = [1, 1]} : vector<2x64xf32> to vector<2x16xf32>
    %28 = arith.negf %27 : vector<2x16xf32>
    %29 = math.exp %28 : vector<2x16xf32>
    %cst_15 = arith.constant 1.000000e+00 : f32
    %30 = vector.broadcast %cst_15 : f32 to vector<2x16xf32>
    %31 = arith.addf %30, %29 : vector<2x16xf32>
    %32 = arith.divf %30, %31 : vector<2x16xf32>
    %33 = vector.extract_strided_slice %20 {offsets = [0, 16], sizes = [2, 16], strides = [1, 1]} : vector<2x64xf32> to vector<2x16xf32>
    %34 = arith.negf %33 : vector<2x16xf32>
    %35 = math.exp %34 : vector<2x16xf32>
    %cst_16 = arith.constant 1.000000e+00 : f32
    %36 = vector.broadcast %cst_16 : f32 to vector<2x16xf32>
    %37 = arith.addf %36, %35 : vector<2x16xf32>
    %38 = arith.divf %36, %37 : vector<2x16xf32>
    %39 = vector.extract_strided_slice %20 {offsets = [0, 32], sizes = [2, 16], strides = [1, 1]} : vector<2x64xf32> to vector<2x16xf32>
    %40 = math.tanh %39 : vector<2x16xf32>
    %41 = vector.extract_strided_slice %20 {offsets = [0, 48], sizes = [2, 16], strides = [1, 1]} : vector<2x64xf32> to vector<2x16xf32>
    %42 = arith.negf %41 : vector<2x16xf32>
    %43 = math.exp %42 : vector<2x16xf32>
    %cst_17 = arith.constant 1.000000e+00 : f32
    %44 = vector.broadcast %cst_17 : f32 to vector<2x16xf32>
    %45 = arith.addf %44, %43 : vector<2x16xf32>
    %46 = arith.divf %44, %45 : vector<2x16xf32>
    %47 = arith.mulf %38, %10 : vector<2x16xf32>
    %48 = arith.mulf %32, %40 : vector<2x16xf32>
    %49 = arith.addf %47, %48 : vector<2x16xf32>
    %50 = math.tanh %49 : vector<2x16xf32>
    %51 = arith.mulf %46, %50 : vector<2x16xf32>
    %52 = vector.extract_strided_slice %26 {offsets = [0, 0], sizes = [2, 16], strides = [1, 1]} : vector<2x64xf32> to vector<2x16xf32>
    %53 = arith.negf %52 : vector<2x16xf32>
    %54 = math.exp %53 : vector<2x16xf32>
    %cst_18 = arith.constant 1.000000e+00 : f32
    %55 = vector.broadcast %cst_18 : f32 to vector<2x16xf32>
    %56 = arith.addf %55, %54 : vector<2x16xf32>
    %57 = arith.divf %55, %56 : vector<2x16xf32>
    %58 = vector.extract_strided_slice %26 {offsets = [0, 16], sizes = [2, 16], strides = [1, 1]} : vector<2x64xf32> to vector<2x16xf32>
    %59 = arith.negf %58 : vector<2x16xf32>
    %60 = math.exp %59 : vector<2x16xf32>
    %cst_19 = arith.constant 1.000000e+00 : f32
    %61 = vector.broadcast %cst_19 : f32 to vector<2x16xf32>
    %62 = arith.addf %61, %60 : vector<2x16xf32>
    %63 = arith.divf %61, %62 : vector<2x16xf32>
    %64 = vector.extract_strided_slice %26 {offsets = [0, 32], sizes = [2, 16], strides = [1, 1]} : vector<2x64xf32> to vector<2x16xf32>
    %65 = math.tanh %64 : vector<2x16xf32>
    %66 = vector.extract_strided_slice %26 {offsets = [0, 48], sizes = [2, 16], strides = [1, 1]} : vector<2x64xf32> to vector<2x16xf32>
    %67 = arith.negf %66 : vector<2x16xf32>
    %68 = math.exp %67 : vector<2x16xf32>
    %cst_20 = arith.constant 1.000000e+00 : f32
    %69 = vector.broadcast %cst_20 : f32 to vector<2x16xf32>
    %70 = arith.addf %69, %68 : vector<2x16xf32>
    %71 = arith.divf %69, %70 : vector<2x16xf32>
    %72 = arith.mulf %63, %10 : vector<2x16xf32>
    %73 = arith.mulf %57, %65 : vector<2x16xf32>
    %74 = arith.addf %72, %73 : vector<2x16xf32>
    %75 = math.tanh %74 : vector<2x16xf32>
    %76 = arith.mulf %71, %75 : vector<2x16xf32>
    %77 = arith.truncf %51 : vector<2x16xf32> to vector<2x16xbf16>
    %78 = arith.index_cast %c0_i32 : i32 to index
    %c0_21 = arith.constant 0 : index
    %c0_22 = arith.constant 0 : index
    %79 = vector.load %arg4[%78, %c0_21, %c0_22] : memref<8x2x32xbf16, #tpu.memory_space<vmem>>, vector<1x2x16xbf16>
    %80 = vector.shape_cast %79 : vector<1x2x16xbf16> to vector<2x16xbf16>
    %81 = vector.shape_cast %77 : vector<2x16xbf16> to vector<1x2x16xbf16>
    tpu.vector_store %arg4[%78, %c0_21, %c0_22], %81 {strides = array<i32>} : memref<8x2x32xbf16, #tpu.memory_space<vmem>>, vector<1x2x16xbf16>,
    %82 = arith.truncf %76 : vector<2x16xf32> to vector<2x16xbf16>
    %83 = arith.index_cast %11 : i32 to index
    %c0_23 = arith.constant 0 : index
    %c16 = arith.constant 16 : index
    %84 = vector.load %arg4[%83, %c0_23, %c16] : memref<8x2x32xbf16, #tpu.memory_space<vmem>>, vector<1x2x16xbf16>
    %85 = vector.shape_cast %84 : vector<1x2x16xbf16> to vector<2x16xbf16>
    %86 = vector.shape_cast %82 : vector<2x16xbf16> to vector<1x2x16xbf16>
    tpu.vector_store %arg4[%83, %c0_23, %c16], %86 {strides = array<i32>} : memref<8x2x32xbf16, #tpu.memory_space<vmem>>, vector<1x2x16xbf16>,
    %c1_i32 = arith.constant 1 : i32
    %c7_i32_24 = arith.constant 7 : i32
    %87 = arith.subi %c7_i32_24, %c1_i32 : i32
    %88 = tpu.concatenate %51, %76 in 1 : vector<2x16xf32>, vector<2x16xf32> -> vector<2x32xf32>
    %89 = arith.truncf %88 : vector<2x32xf32> to vector<2x32xbf16>
    %cst_25 = arith.constant dense<0.000000e+00> : vector<2x128xf32>
    %90 = tpu.matmul %89, %9, %cst_25 {dimension_numbers = #tpu.dot_dimension_numbers<[1], [0], [0], [1], [0, 0, 1, 1], [], []>} : vector<2x32xbf16>, vector<32x128xbf16>, vector<2x128xf32> -> vector<2x128xf32>
    %91 = arith.index_cast %c1_i32 : i32 to index
    %c0_26 = arith.constant 0 : index
    %c0_27 = arith.constant 0 : index
    %92 = vector.load %arg5[%91, %c0_26, %c0_27] : memref<8x2x128xbf16, #tpu.memory_space<vmem>>, vector<1x2x64xbf16>
    %93 = vector.shape_cast %92 : vector<1x2x64xbf16> to vector<2x64xbf16>
    %94 = arith.extf %93 : vector<2x64xbf16> to vector<2x64xf32>
    %95 = vector.extract_strided_slice %90 {offsets = [0, 0], sizes = [2, 64], strides = [1, 1]} : vector<2x128xf32> to vector<2x64xf32>
    %96 = arith.addf %94, %95 : vector<2x64xf32>
    %97 = arith.index_cast %87 : i32 to index
    %c0_28 = arith.constant 0 : index
    %c64_29 = arith.constant 64 : index
    %98 = vector.load %arg5[%97, %c0_28, %c64_29] : memref<8x2x128xbf16, #tpu.memory_space<vmem>>, vector<1x2x64xbf16>
    %99 = vector.shape_cast %98 : vector<1x2x64xbf16> to vector<2x64xbf16>
    %100 = arith.extf %99 : vector<2x64xbf16> to vector<2x64xf32>
    %101 = vector.extract_strided_slice %90 {offsets = [0, 64], sizes = [2, 64], strides = [1, 1]} : vector<2x128xf32> to vector<2x64xf32>
    %102 = arith.addf %100, %101 : vector<2x64xf32>
    %103 = vector.extract_strided_slice %96 {offsets = [0, 0], sizes = [2, 16], strides = [1, 1]} : vector<2x64xf32> to vector<2x16xf32>
    %104 = arith.negf %103 : vector<2x16xf32>
    %105 = math.exp %104 : vector<2x16xf32>
    %cst_30 = arith.constant 1.000000e+00 : f32
    %106 = vector.broadcast %cst_30 : f32 to vector<2x16xf32>
    %107 = arith.addf %106, %105 : vector<2x16xf32>
    %108 = arith.divf %106, %107 : vector<2x16xf32>
    %109 = vector.extract_strided_slice %96 {offsets = [0, 16], sizes = [2, 16], strides = [1, 1]} : vector<2x64xf32> to vector<2x16xf32>
    %110 = arith.negf %109 : vector<2x16xf32>
    %111 = math.exp %110 : vector<2x16xf32>
    %cst_31 = arith.constant 1.000000e+00 : f32
    %112 = vector.broadcast %cst_31 : f32 to vector<2x16xf32>
    %113 = arith.addf %112, %111 : vector<2x16xf32>
    %114 = arith.divf %112, %113 : vector<2x16xf32>
    %115 = vector.extract_strided_slice %96 {offsets = [0, 32], sizes = [2, 16], strides = [1, 1]} : vector<2x64xf32> to vector<2x16xf32>
    %116 = math.tanh %115 : vector<2x16xf32>
    %117 = vector.extract_strided_slice %96 {offsets = [0, 48], sizes = [2, 16], strides = [1, 1]} : vector<2x64xf32> to vector<2x16xf32>
    %118 = arith.negf %117 : vector<2x16xf32>
    %119 = math.exp %118 : vector<2x16xf32>
    %cst_32 = arith.constant 1.000000e+00 : f32
    %120 = vector.broadcast %cst_32 : f32 to vector<2x16xf32>
    %121 = arith.addf %120, %119 : vector<2x16xf32>
    %122 = arith.divf %120, %121 : vector<2x16xf32>
    %123 = arith.mulf %114, %49 : vector<2x16xf32>
    %124 = arith.mulf %108, %116 : vector<2x16xf32>
    %125 = arith.addf %123, %124 : vector<2x16xf32>
    %126 = math.tanh %125 : vector<2x16xf32>
    %127 = arith.mulf %122, %126 : vector<2x16xf32>
    %128 = vector.extract_strided_slice %102 {offsets = [0, 0], sizes = [2, 16], strides = [1, 1]} : vector<2x64xf32> to vector<2x16xf32>
    %129 = arith.negf %128 : vector<2x16xf32>
    %130 = math.exp %129 : vector<2x16xf32>
    %cst_33 = arith.constant 1.000000e+00 : f32
    %131 = vector.broadcast %cst_33 : f32 to vector<2x16xf32>
    %132 = arith.addf %131, %130 : vector<2x16xf32>
    %133 = arith.divf %131, %132 : vector<2x16xf32>
    %134 = vector.extract_strided_slice %102 {offsets = [0, 16], sizes = [2, 16], strides = [1, 1]} : vector<2x64xf32> to vector<2x16xf32>
    %135 = arith.negf %134 : vector<2x16xf32>
    %136 = math.exp %135 : vector<2x16xf32>
    %cst_34 = arith.constant 1.000000e+00 : f32
    %137 = vector.broadcast %cst_34 : f32 to vector<2x16xf32>
    %138 = arith.addf %137, %136 : vector<2x16xf32>
    %139 = arith.divf %137, %138 : vector<2x16xf32>
    %140 = vector.extract_strided_slice %102 {offsets = [0, 32], sizes = [2, 16], strides = [1, 1]} : vector<2x64xf32> to vector<2x16xf32>
    %141 = math.tanh %140 : vector<2x16xf32>
    %142 = vector.extract_strided_slice %102 {offsets = [0, 48], sizes = [2, 16], strides = [1, 1]} : vector<2x64xf32> to vector<2x16xf32>
    %143 = arith.negf %142 : vector<2x16xf32>
    %144 = math.exp %143 : vector<2x16xf32>
    %cst_35 = arith.constant 1.000000e+00 : f32
    %145 = vector.broadcast %cst_35 : f32 to vector<2x16xf32>
    %146 = arith.addf %145, %144 : vector<2x16xf32>
    %147 = arith.divf %145, %146 : vector<2x16xf32>
    %148 = arith.mulf %139, %74 : vector<2x16xf32>
    %149 = arith.mulf %133, %141 : vector<2x16xf32>
    %150 = arith.addf %148, %149 : vector<2x16xf32>
    %151 = math.tanh %150 : vector<2x16xf32>
    %152 = arith.mulf %147, %151 : vector<2x16xf32>
    %153 = arith.truncf %127 : vector<2x16xf32> to vector<2x16xbf16>
    %154 = arith.index_cast %c1_i32 : i32 to index
    %c0_36 = arith.constant 0 : index
    %c0_37 = arith.constant 0 : index
    %155 = vector.load %arg4[%154, %c0_36, %c0_37] : memref<8x2x32xbf16, #tpu.memory_space<vmem>>, vector<1x2x16xbf16>
    %156 = vector.shape_cast %155 : vector<1x2x16xbf16> to vector<2x16xbf16>
    %157 = vector.shape_cast %153 : vector<2x16xbf16> to vector<1x2x16xbf16>
    tpu.vector_store %arg4[%154, %c0_36, %c0_37], %157 {strides = array<i32>} : memref<8x2x32xbf16, #tpu.memory_space<vmem>>, vector<1x2x16xbf16>,
    %158 = arith.truncf %152 : vector<2x16xf32> to vector<2x16xbf16>
    %159 = arith.index_cast %87 : i32 to index
    %c0_38 = arith.constant 0 : index
    %c16_39 = arith.constant 16 : index
    %160 = vector.load %arg4[%159, %c0_38, %c16_39] : memref<8x2x32xbf16, #tpu.memory_space<vmem>>, vector<1x2x16xbf16>
    %161 = vector.shape_cast %160 : vector<1x2x16xbf16> to vector<2x16xbf16>
    %162 = vector.shape_cast %158 : vector<2x16xbf16> to vector<1x2x16xbf16>
    tpu.vector_store %arg4[%159, %c0_38, %c16_39], %162 {strides = array<i32>} : memref<8x2x32xbf16, #tpu.memory_space<vmem>>, vector<1x2x16xbf16>,
    %c2_i32 = arith.constant 2 : i32
    %c7_i32_40 = arith.constant 7 : i32
    %163 = arith.subi %c7_i32_40, %c2_i32 : i32
    %164 = tpu.concatenate %127, %152 in 1 : vector<2x16xf32>, vector<2x16xf32> -> vector<2x32xf32>
    %165 = arith.truncf %164 : vector<2x32xf32> to vector<2x32xbf16>
    %cst_41 = arith.constant dense<0.000000e+00> : vector<2x128xf32>
    %166 = tpu.matmul %165, %9, %cst_41 {dimension_numbers = #tpu.dot_dimension_numbers<[1], [0], [0], [1], [0, 0, 1, 1], [], []>} : vector<2x32xbf16>, vector<32x128xbf16>, vector<2x128xf32> -> vector<2x128xf32>
    %167 = arith.index_cast %c2_i32 : i32 to index
    %c0_42 = arith.constant 0 : index
    %c0_43 = arith.constant 0 : index
    %168 = vector.load %arg5[%167, %c0_42, %c0_43] : memref<8x2x128xbf16, #tpu.memory_space<vmem>>, vector<1x2x64xbf16>
    %169 = vector.shape_cast %168 : vector<1x2x64xbf16> to vector<2x64xbf16>
    %170 = arith.extf %169 : vector<2x64xbf16> to vector<2x64xf32>
    %171 = vector.extract_strided_slice %166 {offsets = [0, 0], sizes = [2, 64], strides = [1, 1]} : vector<2x128xf32> to vector<2x64xf32>
    %172 = arith.addf %170, %171 : vector<2x64xf32>
    %173 = arith.index_cast %163 : i32 to index
    %c0_44 = arith.constant 0 : index
    %c64_45 = arith.constant 64 : index
    %174 = vector.load %arg5[%173, %c0_44, %c64_45] : memref<8x2x128xbf16, #tpu.memory_space<vmem>>, vector<1x2x64xbf16>
    %175 = vector.shape_cast %174 : vector<1x2x64xbf16> to vector<2x64xbf16>
    %176 = arith.extf %175 : vector<2x64xbf16> to vector<2x64xf32>
    %177 = vector.extract_strided_slice %166 {offsets = [0, 64], sizes = [2, 64], strides = [1, 1]} : vector<2x128xf32> to vector<2x64xf32>
    %178 = arith.addf %176, %177 : vector<2x64xf32>
    %179 = vector.extract_strided_slice %172 {offsets = [0, 0], sizes = [2, 16], strides = [1, 1]} : vector<2x64xf32> to vector<2x16xf32>
    %180 = arith.negf %179 : vector<2x16xf32>
    %181 = math.exp %180 : vector<2x16xf32>
    %cst_46 = arith.constant 1.000000e+00 : f32
    %182 = vector.broadcast %cst_46 : f32 to vector<2x16xf32>
    %183 = arith.addf %182, %181 : vector<2x16xf32>
    %184 = arith.divf %182, %183 : vector<2x16xf32>
    %185 = vector.extract_strided_slice %172 {offsets = [0, 16], sizes = [2, 16], strides = [1, 1]} : vector<2x64xf32> to vector<2x16xf32>
    %186 = arith.negf %185 : vector<2x16xf32>
    %187 = math.exp %186 : vector<2x16xf32>
    %cst_47 = arith.constant 1.000000e+00 : f32
    %188 = vector.broadcast %cst_47 : f32 to vector<2x16xf32>
    %189 = arith.addf %188, %187 : vector<2x16xf32>
    %190 = arith.divf %188, %189 : vector<2x16xf32>
    %191 = vector.extract_strided_slice %172 {offsets = [0, 32], sizes = [2, 16], strides = [1, 1]} : vector<2x64xf32> to vector<2x16xf32>
    %192 = math.tanh %191 : vector<2x16xf32>
    %193 = vector.extract_strided_slice %172 {offsets = [0, 48], sizes = [2, 16], strides = [1, 1]} : vector<2x64xf32> to vector<2x16xf32>
    %194 = arith.negf %193 : vector<2x16xf32>
    %195 = math.exp %194 : vector<2x16xf32>
    %cst_48 = arith.constant 1.000000e+00 : f32
    %196 = vector.broadcast %cst_48 : f32 to vector<2x16xf32>
    %197 = arith.addf %196, %195 : vector<2x16xf32>
    %198 = arith.divf %196, %197 : vector<2x16xf32>
    %199 = arith.mulf %190, %125 : vector<2x16xf32>
    %200 = arith.mulf %184, %192 : vector<2x16xf32>
    %201 = arith.addf %199, %200 : vector<2x16xf32>
    %202 = math.tanh %201 : vector<2x16xf32>
    %203 = arith.mulf %198, %202 : vector<2x16xf32>
    %204 = vector.extract_strided_slice %178 {offsets = [0, 0], sizes = [2, 16], strides = [1, 1]} : vector<2x64xf32> to vector<2x16xf32>
    %205 = arith.negf %204 : vector<2x16xf32>
    %206 = math.exp %205 : vector<2x16xf32>
    %cst_49 = arith.constant 1.000000e+00 : f32
    %207 = vector.broadcast %cst_49 : f32 to vector<2x16xf32>
    %208 = arith.addf %207, %206 : vector<2x16xf32>
    %209 = arith.divf %207, %208 : vector<2x16xf32>
    %210 = vector.extract_strided_slice %178 {offsets = [0, 16], sizes = [2, 16], strides = [1, 1]} : vector<2x64xf32> to vector<2x16xf32>
    %211 = arith.negf %210 : vector<2x16xf32>
    %212 = math.exp %211 : vector<2x16xf32>
    %cst_50 = arith.constant 1.000000e+00 : f32
    %213 = vector.broadcast %cst_50 : f32 to vector<2x16xf32>
    %214 = arith.addf %213, %212 : vector<2x16xf32>
    %215 = arith.divf %213, %214 : vector<2x16xf32>
    %216 = vector.extract_strided_slice %178 {offsets = [0, 32], sizes = [2, 16], strides = [1, 1]} : vector<2x64xf32> to vector<2x16xf32>
    %217 = math.tanh %216 : vector<2x16xf32>
    %218 = vector.extract_strided_slice %178 {offsets = [0, 48], sizes = [2, 16], strides = [1, 1]} : vector<2x64xf32> to vector<2x16xf32>
    %219 = arith.negf %218 : vector<2x16xf32>
    %220 = math.exp %219 : vector<2x16xf32>
    %cst_51 = arith.constant 1.000000e+00 : f32
    %221 = vector.broadcast %cst_51 : f32 to vector<2x16xf32>
    %222 = arith.addf %221, %220 : vector<2x16xf32>
    %223 = arith.divf %221, %222 : vector<2x16xf32>
    %224 = arith.mulf %215, %150 : vector<2x16xf32>
    %225 = arith.mulf %209, %217 : vector<2x16xf32>
    %226 = arith.addf %224, %225 : vector<2x16xf32>
    %227 = math.tanh %226 : vector<2x16xf32>
    %228 = arith.mulf %223, %227 : vector<2x16xf32>
    %229 = arith.truncf %203 : vector<2x16xf32> to vector<2x16xbf16>
    %230 = arith.index_cast %c2_i32 : i32 to index
    %c0_52 = arith.constant 0 : index
    %c0_53 = arith.constant 0 : index
    %231 = vector.load %arg4[%230, %c0_52, %c0_53] : memref<8x2x32xbf16, #tpu.memory_space<vmem>>, vector<1x2x16xbf16>
    %232 = vector.shape_cast %231 : vector<1x2x16xbf16> to vector<2x16xbf16>
    %233 = vector.shape_cast %229 : vector<2x16xbf16> to vector<1x2x16xbf16>
    tpu.vector_store %arg4[%230, %c0_52, %c0_53], %233 {strides = array<i32>} : memref<8x2x32xbf16, #tpu.memory_space<vmem>>, vector<1x2x16xbf16>,
    %234 = arith.truncf %228 : vector<2x16xf32> to vector<2x16xbf16>
    %235 = arith.index_cast %163 : i32 to index
    %c0_54 = arith.constant 0 : index
    %c16_55 = arith.constant 16 : index
    %236 = vector.load %arg4[%235, %c0_54, %c16_55] : memref<8x2x32xbf16, #tpu.memory_space<vmem>>, vector<1x2x16xbf16>
    %237 = vector.shape_cast %236 : vector<1x2x16xbf16> to vector<2x16xbf16>
    %238 = vector.shape_cast %234 : vector<2x16xbf16> to vector<1x2x16xbf16>
    tpu.vector_store %arg4[%235, %c0_54, %c16_55], %238 {strides = array<i32>} : memref<8x2x32xbf16, #tpu.memory_space<vmem>>, vector<1x2x16xbf16>,
    %c3_i32 = arith.constant 3 : i32
    %c7_i32_56 = arith.constant 7 : i32
    %239 = arith.subi %c7_i32_56, %c3_i32 : i32
    %240 = tpu.concatenate %203, %228 in 1 : vector<2x16xf32>, vector<2x16xf32> -> vector<2x32xf32>
    %241 = arith.truncf %240 : vector<2x32xf32> to vector<2x32xbf16>
    %cst_57 = arith.constant dense<0.000000e+00> : vector<2x128xf32>
    %242 = tpu.matmul %241, %9, %cst_57 {dimension_numbers = #tpu.dot_dimension_numbers<[1], [0], [0], [1], [0, 0, 1, 1], [], []>} : vector<2x32xbf16>, vector<32x128xbf16>, vector<2x128xf32> -> vector<2x128xf32>
    %243 = arith.index_cast %c3_i32 : i32 to index
    %c0_58 = arith.constant 0 : index
    %c0_59 = arith.constant 0 : index
    %244 = vector.load %arg5[%243, %c0_58, %c0_59] : memref<8x2x128xbf16, #tpu.memory_space<vmem>>, vector<1x2x64xbf16>
    %245 = vector.shape_cast %244 : vector<1x2x64xbf16> to vector<2x64xbf16>
    %246 = arith.extf %245 : vector<2x64xbf16> to vector<2x64xf32>
    %247 = vector.extract_strided_slice %242 {offsets = [0, 0], sizes = [2, 64], strides = [1, 1]} : vector<2x128xf32> to vector<2x64xf32>
    %248 = arith.addf %246, %247 : vector<2x64xf32>
    %249 = arith.index_cast %239 : i32 to index
    %c0_60 = arith.constant 0 : index
    %c64_61 = arith.constant 64 : index
    %250 = vector.load %arg5[%249, %c0_60, %c64_61] : memref<8x2x128xbf16, #tpu.memory_space<vmem>>, vector<1x2x64xbf16>
    %251 = vector.shape_cast %250 : vector<1x2x64xbf16> to vector<2x64xbf16>
    %252 = arith.extf %251 : vector<2x64xbf16> to vector<2x64xf32>
    %253 = vector.extract_strided_slice %242 {offsets = [0, 64], sizes = [2, 64], strides = [1, 1]} : vector<2x128xf32> to vector<2x64xf32>
    %254 = arith.addf %252, %253 : vector<2x64xf32>
    %255 = vector.extract_strided_slice %248 {offsets = [0, 0], sizes = [2, 16], strides = [1, 1]} : vector<2x64xf32> to vector<2x16xf32>
    %256 = arith.negf %255 : vector<2x16xf32>
    %257 = math.exp %256 : vector<2x16xf32>
    %cst_62 = arith.constant 1.000000e+00 : f32
    %258 = vector.broadcast %cst_62 : f32 to vector<2x16xf32>
    %259 = arith.addf %258, %257 : vector<2x16xf32>
    %260 = arith.divf %258, %259 : vector<2x16xf32>
    %261 = vector.extract_strided_slice %248 {offsets = [0, 16], sizes = [2, 16], strides = [1, 1]} : vector<2x64xf32> to vector<2x16xf32>
    %262 = arith.negf %261 : vector<2x16xf32>
    %263 = math.exp %262 : vector<2x16xf32>
    %cst_63 = arith.constant 1.000000e+00 : f32
    %264 = vector.broadcast %cst_63 : f32 to vector<2x16xf32>
    %265 = arith.addf %264, %263 : vector<2x16xf32>
    %266 = arith.divf %264, %265 : vector<2x16xf32>
    %267 = vector.extract_strided_slice %248 {offsets = [0, 32], sizes = [2, 16], strides = [1, 1]} : vector<2x64xf32> to vector<2x16xf32>
    %268 = math.tanh %267 : vector<2x16xf32>
    %269 = vector.extract_strided_slice %248 {offsets = [0, 48], sizes = [2, 16], strides = [1, 1]} : vector<2x64xf32> to vector<2x16xf32>
    %270 = arith.negf %269 : vector<2x16xf32>
    %271 = math.exp %270 : vector<2x16xf32>
    %cst_64 = arith.constant 1.000000e+00 : f32
    %272 = vector.broadcast %cst_64 : f32 to vector<2x16xf32>
    %273 = arith.addf %272, %271 : vector<2x16xf32>
    %274 = arith.divf %272, %273 : vector<2x16xf32>
    %275 = arith.mulf %266, %201 : vector<2x16xf32>
    %276 = arith.mulf %260, %268 : vector<2x16xf32>
    %277 = arith.addf %275, %276 : vector<2x16xf32>
    %278 = math.tanh %277 : vector<2x16xf32>
    %279 = arith.mulf %274, %278 : vector<2x16xf32>
    %280 = vector.extract_strided_slice %254 {offsets = [0, 0], sizes = [2, 16], strides = [1, 1]} : vector<2x64xf32> to vector<2x16xf32>
    %281 = arith.negf %280 : vector<2x16xf32>
    %282 = math.exp %281 : vector<2x16xf32>
    %cst_65 = arith.constant 1.000000e+00 : f32
    %283 = vector.broadcast %cst_65 : f32 to vector<2x16xf32>
    %284 = arith.addf %283, %282 : vector<2x16xf32>
    %285 = arith.divf %283, %284 : vector<2x16xf32>
    %286 = vector.extract_strided_slice %254 {offsets = [0, 16], sizes = [2, 16], strides = [1, 1]} : vector<2x64xf32> to vector<2x16xf32>
    %287 = arith.negf %286 : vector<2x16xf32>
    %288 = math.exp %287 : vector<2x16xf32>
    %cst_66 = arith.constant 1.000000e+00 : f32
    %289 = vector.broadcast %cst_66 : f32 to vector<2x16xf32>
    %290 = arith.addf %289, %288 : vector<2x16xf32>
    %291 = arith.divf %289, %290 : vector<2x16xf32>
    %292 = vector.extract_strided_slice %254 {offsets = [0, 32], sizes = [2, 16], strides = [1, 1]} : vector<2x64xf32> to vector<2x16xf32>
    %293 = math.tanh %292 : vector<2x16xf32>
    %294 = vector.extract_strided_slice %254 {offsets = [0, 48], sizes = [2, 16], strides = [1, 1]} : vector<2x64xf32> to vector<2x16xf32>
    %295 = arith.negf %294 : vector<2x16xf32>
    %296 = math.exp %295 : vector<2x16xf32>
    %cst_67 = arith.constant 1.000000e+00 : f32
    %297 = vector.broadcast %cst_67 : f32 to vector<2x16xf32>
    %298 = arith.addf %297, %296 : vector<2x16xf32>
    %299 = arith.divf %297, %298 : vector<2x16xf32>
    %300 = arith.mulf %291, %226 : vector<2x16xf32>
    %301 = arith.mulf %285, %293 : vector<2x16xf32>
    %302 = arith.addf %300, %301 : vector<2x16xf32>
    %303 = math.tanh %302 : vector<2x16xf32>
    %304 = arith.mulf %299, %303 : vector<2x16xf32>
    %305 = arith.truncf %279 : vector<2x16xf32> to vector<2x16xbf16>
    %306 = arith.index_cast %c3_i32 : i32 to index
    %c0_68 = arith.constant 0 : index
    %c0_69 = arith.constant 0 : index
    %307 = vector.load %arg4[%306, %c0_68, %c0_69] : memref<8x2x32xbf16, #tpu.memory_space<vmem>>, vector<1x2x16xbf16>
    %308 = vector.shape_cast %307 : vector<1x2x16xbf16> to vector<2x16xbf16>
    %309 = vector.shape_cast %305 : vector<2x16xbf16> to vector<1x2x16xbf16>
    tpu.vector_store %arg4[%306, %c0_68, %c0_69], %309 {strides = array<i32>} : memref<8x2x32xbf16, #tpu.memory_space<vmem>>, vector<1x2x16xbf16>,
    %310 = arith.truncf %304 : vector<2x16xf32> to vector<2x16xbf16>
    %311 = arith.index_cast %239 : i32 to index
    %c0_70 = arith.constant 0 : index
    %c16_71 = arith.constant 16 : index
    %312 = vector.load %arg4[%311, %c0_70, %c16_71] : memref<8x2x32xbf16, #tpu.memory_space<vmem>>, vector<1x2x16xbf16>
    %313 = vector.shape_cast %312 : vector<1x2x16xbf16> to vector<2x16xbf16>
    %314 = vector.shape_cast %310 : vector<2x16xbf16> to vector<1x2x16xbf16>
    tpu.vector_store %arg4[%311, %c0_70, %c16_71], %314 {strides = array<i32>} : memref<8x2x32xbf16, #tpu.memory_space<vmem>>, vector<1x2x16xbf16>,
    %c4_i32 = arith.constant 4 : i32
    %c7_i32_72 = arith.constant 7 : i32
    %315 = arith.subi %c7_i32_72, %c4_i32 : i32
    %316 = tpu.concatenate %279, %304 in 1 : vector<2x16xf32>, vector<2x16xf32> -> vector<2x32xf32>
    %317 = arith.truncf %316 : vector<2x32xf32> to vector<2x32xbf16>
    %cst_73 = arith.constant dense<0.000000e+00> : vector<2x128xf32>
    %318 = tpu.matmul %317, %9, %cst_73 {dimension_numbers = #tpu.dot_dimension_numbers<[1], [0], [0], [1], [0, 0, 1, 1], [], []>} : vector<2x32xbf16>, vector<32x128xbf16>, vector<2x128xf32> -> vector<2x128xf32>
    %319 = arith.index_cast %c4_i32 : i32 to index
    %c0_74 = arith.constant 0 : index
    %c0_75 = arith.constant 0 : index
    %320 = vector.load %arg5[%319, %c0_74, %c0_75] : memref<8x2x128xbf16, #tpu.memory_space<vmem>>, vector<1x2x64xbf16>
    %321 = vector.shape_cast %320 : vector<1x2x64xbf16> to vector<2x64xbf16>
    %322 = arith.extf %321 : vector<2x64xbf16> to vector<2x64xf32>
    %323 = vector.extract_strided_slice %318 {offsets = [0, 0], sizes = [2, 64], strides = [1, 1]} : vector<2x128xf32> to vector<2x64xf32>
    %324 = arith.addf %322, %323 : vector<2x64xf32>
    %325 = arith.index_cast %315 : i32 to index
    %c0_76 = arith.constant 0 : index
    %c64_77 = arith.constant 64 : index
    %326 = vector.load %arg5[%325, %c0_76, %c64_77] : memref<8x2x128xbf16, #tpu.memory_space<vmem>>, vector<1x2x64xbf16>
    %327 = vector.shape_cast %326 : vector<1x2x64xbf16> to vector<2x64xbf16>
    %328 = arith.extf %327 : vector<2x64xbf16> to vector<2x64xf32>
    %329 = vector.extract_strided_slice %318 {offsets = [0, 64], sizes = [2, 64], strides = [1, 1]} : vector<2x128xf32> to vector<2x64xf32>
    %330 = arith.addf %328, %329 : vector<2x64xf32>
    %331 = vector.extract_strided_slice %324 {offsets = [0, 0], sizes = [2, 16], strides = [1, 1]} : vector<2x64xf32> to vector<2x16xf32>
    %332 = arith.negf %331 : vector<2x16xf32>
    %333 = math.exp %332 : vector<2x16xf32>
    %cst_78 = arith.constant 1.000000e+00 : f32
    %334 = vector.broadcast %cst_78 : f32 to vector<2x16xf32>
    %335 = arith.addf %334, %333 : vector<2x16xf32>
    %336 = arith.divf %334, %335 : vector<2x16xf32>
    %337 = vector.extract_strided_slice %324 {offsets = [0, 16], sizes = [2, 16], strides = [1, 1]} : vector<2x64xf32> to vector<2x16xf32>
    %338 = arith.negf %337 : vector<2x16xf32>
    %339 = math.exp %338 : vector<2x16xf32>
    %cst_79 = arith.constant 1.000000e+00 : f32
    %340 = vector.broadcast %cst_79 : f32 to vector<2x16xf32>
    %341 = arith.addf %340, %339 : vector<2x16xf32>
    %342 = arith.divf %340, %341 : vector<2x16xf32>
    %343 = vector.extract_strided_slice %324 {offsets = [0, 32], sizes = [2, 16], strides = [1, 1]} : vector<2x64xf32> to vector<2x16xf32>
    %344 = math.tanh %343 : vector<2x16xf32>
    %345 = vector.extract_strided_slice %324 {offsets = [0, 48], sizes = [2, 16], strides = [1, 1]} : vector<2x64xf32> to vector<2x16xf32>
    %346 = arith.negf %345 : vector<2x16xf32>
    %347 = math.exp %346 : vector<2x16xf32>
    %cst_80 = arith.constant 1.000000e+00 : f32
    %348 = vector.broadcast %cst_80 : f32 to vector<2x16xf32>
    %349 = arith.addf %348, %347 : vector<2x16xf32>
    %350 = arith.divf %348, %349 : vector<2x16xf32>
    %351 = arith.mulf %342, %277 : vector<2x16xf32>
    %352 = arith.mulf %336, %344 : vector<2x16xf32>
    %353 = arith.addf %351, %352 : vector<2x16xf32>
    %354 = math.tanh %353 : vector<2x16xf32>
    %355 = arith.mulf %350, %354 : vector<2x16xf32>
    %356 = vector.extract_strided_slice %330 {offsets = [0, 0], sizes = [2, 16], strides = [1, 1]} : vector<2x64xf32> to vector<2x16xf32>
    %357 = arith.negf %356 : vector<2x16xf32>
    %358 = math.exp %357 : vector<2x16xf32>
    %cst_81 = arith.constant 1.000000e+00 : f32
    %359 = vector.broadcast %cst_81 : f32 to vector<2x16xf32>
    %360 = arith.addf %359, %358 : vector<2x16xf32>
    %361 = arith.divf %359, %360 : vector<2x16xf32>
    %362 = vector.extract_strided_slice %330 {offsets = [0, 16], sizes = [2, 16], strides = [1, 1]} : vector<2x64xf32> to vector<2x16xf32>
    %363 = arith.negf %362 : vector<2x16xf32>
    %364 = math.exp %363 : vector<2x16xf32>
    %cst_82 = arith.constant 1.000000e+00 : f32
    %365 = vector.broadcast %cst_82 : f32 to vector<2x16xf32>
    %366 = arith.addf %365, %364 : vector<2x16xf32>
    %367 = arith.divf %365, %366 : vector<2x16xf32>
    %368 = vector.extract_strided_slice %330 {offsets = [0, 32], sizes = [2, 16], strides = [1, 1]} : vector<2x64xf32> to vector<2x16xf32>
    %369 = math.tanh %368 : vector<2x16xf32>
    %370 = vector.extract_strided_slice %330 {offsets = [0, 48], sizes = [2, 16], strides = [1, 1]} : vector<2x64xf32> to vector<2x16xf32>
    %371 = arith.negf %370 : vector<2x16xf32>
    %372 = math.exp %371 : vector<2x16xf32>
    %cst_83 = arith.constant 1.000000e+00 : f32
    %373 = vector.broadcast %cst_83 : f32 to vector<2x16xf32>
    %374 = arith.addf %373, %372 : vector<2x16xf32>
    %375 = arith.divf %373, %374 : vector<2x16xf32>
    %376 = arith.mulf %367, %302 : vector<2x16xf32>
    %377 = arith.mulf %361, %369 : vector<2x16xf32>
    %378 = arith.addf %376, %377 : vector<2x16xf32>
    %379 = math.tanh %378 : vector<2x16xf32>
    %380 = arith.mulf %375, %379 : vector<2x16xf32>
    %381 = arith.truncf %355 : vector<2x16xf32> to vector<2x16xbf16>
    %382 = arith.index_cast %c4_i32 : i32 to index
    %c0_84 = arith.constant 0 : index
    %c0_85 = arith.constant 0 : index
    %383 = vector.load %arg4[%382, %c0_84, %c0_85] : memref<8x2x32xbf16, #tpu.memory_space<vmem>>, vector<1x2x16xbf16>
    %384 = vector.shape_cast %383 : vector<1x2x16xbf16> to vector<2x16xbf16>
    %385 = vector.shape_cast %381 : vector<2x16xbf16> to vector<1x2x16xbf16>
    tpu.vector_store %arg4[%382, %c0_84, %c0_85], %385 {strides = array<i32>} : memref<8x2x32xbf16, #tpu.memory_space<vmem>>, vector<1x2x16xbf16>,
    %386 = arith.truncf %380 : vector<2x16xf32> to vector<2x16xbf16>
    %387 = arith.index_cast %315 : i32 to index
    %c0_86 = arith.constant 0 : index
    %c16_87 = arith.constant 16 : index
    %388 = vector.load %arg4[%387, %c0_86, %c16_87] : memref<8x2x32xbf16, #tpu.memory_space<vmem>>, vector<1x2x16xbf16>
    %389 = vector.shape_cast %388 : vector<1x2x16xbf16> to vector<2x16xbf16>
    %390 = vector.shape_cast %386 : vector<2x16xbf16> to vector<1x2x16xbf16>
    tpu.vector_store %arg4[%387, %c0_86, %c16_87], %390 {strides = array<i32>} : memref<8x2x32xbf16, #tpu.memory_space<vmem>>, vector<1x2x16xbf16>,
    %c5_i32 = arith.constant 5 : i32
    %c7_i32_88 = arith.constant 7 : i32
    %391 = arith.subi %c7_i32_88, %c5_i32 : i32
    %392 = tpu.concatenate %355, %380 in 1 : vector<2x16xf32>, vector<2x16xf32> -> vector<2x32xf32>
    %393 = arith.truncf %392 : vector<2x32xf32> to vector<2x32xbf16>
    %cst_89 = arith.constant dense<0.000000e+00> : vector<2x128xf32>
    %394 = tpu.matmul %393, %9, %cst_89 {dimension_numbers = #tpu.dot_dimension_numbers<[1], [0], [0], [1], [0, 0, 1, 1], [], []>} : vector<2x32xbf16>, vector<32x128xbf16>, vector<2x128xf32> -> vector<2x128xf32>
    %395 = arith.index_cast %c5_i32 : i32 to index
    %c0_90 = arith.constant 0 : index
    %c0_91 = arith.constant 0 : index
    %396 = vector.load %arg5[%395, %c0_90, %c0_91] : memref<8x2x128xbf16, #tpu.memory_space<vmem>>, vector<1x2x64xbf16>
    %397 = vector.shape_cast %396 : vector<1x2x64xbf16> to vector<2x64xbf16>
    %398 = arith.extf %397 : vector<2x64xbf16> to vector<2x64xf32>
    %399 = vector.extract_strided_slice %394 {offsets = [0, 0], sizes = [2, 64], strides = [1, 1]} : vector<2x128xf32> to vector<2x64xf32>
    %400 = arith.addf %398, %399 : vector<2x64xf32>
    %401 = arith.index_cast %391 : i32 to index
    %c0_92 = arith.constant 0 : index
    %c64_93 = arith.constant 64 : index
    %402 = vector.load %arg5[%401, %c0_92, %c64_93] : memref<8x2x128xbf16, #tpu.memory_space<vmem>>, vector<1x2x64xbf16>
    %403 = vector.shape_cast %402 : vector<1x2x64xbf16> to vector<2x64xbf16>
    %404 = arith.extf %403 : vector<2x64xbf16> to vector<2x64xf32>
    %405 = vector.extract_strided_slice %394 {offsets = [0, 64], sizes = [2, 64], strides = [1, 1]} : vector<2x128xf32> to vector<2x64xf32>
    %406 = arith.addf %404, %405 : vector<2x64xf32>
    %407 = vector.extract_strided_slice %400 {offsets = [0, 0], sizes = [2, 16], strides = [1, 1]} : vector<2x64xf32> to vector<2x16xf32>
    %408 = arith.negf %407 : vector<2x16xf32>
    %409 = math.exp %408 : vector<2x16xf32>
    %cst_94 = arith.constant 1.000000e+00 : f32
    %410 = vector.broadcast %cst_94 : f32 to vector<2x16xf32>
    %411 = arith.addf %410, %409 : vector<2x16xf32>
    %412 = arith.divf %410, %411 : vector<2x16xf32>
    %413 = vector.extract_strided_slice %400 {offsets = [0, 16], sizes = [2, 16], strides = [1, 1]} : vector<2x64xf32> to vector<2x16xf32>
    %414 = arith.negf %413 : vector<2x16xf32>
    %415 = math.exp %414 : vector<2x16xf32>
    %cst_95 = arith.constant 1.000000e+00 : f32
    %416 = vector.broadcast %cst_95 : f32 to vector<2x16xf32>
    %417 = arith.addf %416, %415 : vector<2x16xf32>
    %418 = arith.divf %416, %417 : vector<2x16xf32>
    %419 = vector.extract_strided_slice %400 {offsets = [0, 32], sizes = [2, 16], strides = [1, 1]} : vector<2x64xf32> to vector<2x16xf32>
    %420 = math.tanh %419 : vector<2x16xf32>
    %421 = vector.extract_strided_slice %400 {offsets = [0, 48], sizes = [2, 16], strides = [1, 1]} : vector<2x64xf32> to vector<2x16xf32>
    %422 = arith.negf %421 : vector<2x16xf32>
    %423 = math.exp %422 : vector<2x16xf32>
    %cst_96 = arith.constant 1.000000e+00 : f32
    %424 = vector.broadcast %cst_96 : f32 to vector<2x16xf32>
    %425 = arith.addf %424, %423 : vector<2x16xf32>
    %426 = arith.divf %424, %425 : vector<2x16xf32>
    %427 = arith.mulf %418, %353 : vector<2x16xf32>
    %428 = arith.mulf %412, %420 : vector<2x16xf32>
    %429 = arith.addf %427, %428 : vector<2x16xf32>
    %430 = math.tanh %429 : vector<2x16xf32>
    %431 = arith.mulf %426, %430 : vector<2x16xf32>
    %432 = vector.extract_strided_slice %406 {offsets = [0, 0], sizes = [2, 16], strides = [1, 1]} : vector<2x64xf32> to vector<2x16xf32>
    %433 = arith.negf %432 : vector<2x16xf32>
    %434 = math.exp %433 : vector<2x16xf32>
    %cst_97 = arith.constant 1.000000e+00 : f32
    %435 = vector.broadcast %cst_97 : f32 to vector<2x16xf32>
    %436 = arith.addf %435, %434 : vector<2x16xf32>
    %437 = arith.divf %435, %436 : vector<2x16xf32>
    %438 = vector.extract_strided_slice %406 {offsets = [0, 16], sizes = [2, 16], strides = [1, 1]} : vector<2x64xf32> to vector<2x16xf32>
    %439 = arith.negf %438 : vector<2x16xf32>
    %440 = math.exp %439 : vector<2x16xf32>
    %cst_98 = arith.constant 1.000000e+00 : f32
    %441 = vector.broadcast %cst_98 : f32 to vector<2x16xf32>
    %442 = arith.addf %441, %440 : vector<2x16xf32>
    %443 = arith.divf %441, %442 : vector<2x16xf32>
    %444 = vector.extract_strided_slice %406 {offsets = [0, 32], sizes = [2, 16], strides = [1, 1]} : vector<2x64xf32> to vector<2x16xf32>
    %445 = math.tanh %444 : vector<2x16xf32>
    %446 = vector.extract_strided_slice %406 {offsets = [0, 48], sizes = [2, 16], strides = [1, 1]} : vector<2x64xf32> to vector<2x16xf32>
    %447 = arith.negf %446 : vector<2x16xf32>
    %448 = math.exp %447 : vector<2x16xf32>
    %cst_99 = arith.constant 1.000000e+00 : f32
    %449 = vector.broadcast %cst_99 : f32 to vector<2x16xf32>
    %450 = arith.addf %449, %448 : vector<2x16xf32>
    %451 = arith.divf %449, %450 : vector<2x16xf32>
    %452 = arith.mulf %443, %378 : vector<2x16xf32>
    %453 = arith.mulf %437, %445 : vector<2x16xf32>
    %454 = arith.addf %452, %453 : vector<2x16xf32>
    %455 = math.tanh %454 : vector<2x16xf32>
    %456 = arith.mulf %451, %455 : vector<2x16xf32>
    %457 = arith.truncf %431 : vector<2x16xf32> to vector<2x16xbf16>
    %458 = arith.index_cast %c5_i32 : i32 to index
    %c0_100 = arith.constant 0 : index
    %c0_101 = arith.constant 0 : index
    %459 = vector.load %arg4[%458, %c0_100, %c0_101] : memref<8x2x32xbf16, #tpu.memory_space<vmem>>, vector<1x2x16xbf16>
    %460 = vector.shape_cast %459 : vector<1x2x16xbf16> to vector<2x16xbf16>
    %461 = vector.shape_cast %457 : vector<2x16xbf16> to vector<1x2x16xbf16>
    tpu.vector_store %arg4[%458, %c0_100, %c0_101], %461 {strides = array<i32>} : memref<8x2x32xbf16, #tpu.memory_space<vmem>>, vector<1x2x16xbf16>,
    %462 = arith.truncf %456 : vector<2x16xf32> to vector<2x16xbf16>
    %463 = arith.index_cast %391 : i32 to index
    %c0_102 = arith.constant 0 : index
    %c16_103 = arith.constant 16 : index
    %464 = vector.load %arg4[%463, %c0_102, %c16_103] : memref<8x2x32xbf16, #tpu.memory_space<vmem>>, vector<1x2x16xbf16>
    %465 = vector.shape_cast %464 : vector<1x2x16xbf16> to vector<2x16xbf16>
    %466 = vector.shape_cast %462 : vector<2x16xbf16> to vector<1x2x16xbf16>
    tpu.vector_store %arg4[%463, %c0_102, %c16_103], %466 {strides = array<i32>} : memref<8x2x32xbf16, #tpu.memory_space<vmem>>, vector<1x2x16xbf16>,
    %c6_i32 = arith.constant 6 : i32
    %c7_i32_104 = arith.constant 7 : i32
    %467 = arith.subi %c7_i32_104, %c6_i32 : i32
    %468 = tpu.concatenate %431, %456 in 1 : vector<2x16xf32>, vector<2x16xf32> -> vector<2x32xf32>
    %469 = arith.truncf %468 : vector<2x32xf32> to vector<2x32xbf16>
    %cst_105 = arith.constant dense<0.000000e+00> : vector<2x128xf32>
    %470 = tpu.matmul %469, %9, %cst_105 {dimension_numbers = #tpu.dot_dimension_numbers<[1], [0], [0], [1], [0, 0, 1, 1], [], []>} : vector<2x32xbf16>, vector<32x128xbf16>, vector<2x128xf32> -> vector<2x128xf32>
    %471 = arith.index_cast %c6_i32 : i32 to index
    %c0_106 = arith.constant 0 : index
    %c0_107 = arith.constant 0 : index
    %472 = vector.load %arg5[%471, %c0_106, %c0_107] : memref<8x2x128xbf16, #tpu.memory_space<vmem>>, vector<1x2x64xbf16>
    %473 = vector.shape_cast %472 : vector<1x2x64xbf16> to vector<2x64xbf16>
    %474 = arith.extf %473 : vector<2x64xbf16> to vector<2x64xf32>
    %475 = vector.extract_strided_slice %470 {offsets = [0, 0], sizes = [2, 64], strides = [1, 1]} : vector<2x128xf32> to vector<2x64xf32>
    %476 = arith.addf %474, %475 : vector<2x64xf32>
    %477 = arith.index_cast %467 : i32 to index
    %c0_108 = arith.constant 0 : index
    %c64_109 = arith.constant 64 : index
    %478 = vector.load %arg5[%477, %c0_108, %c64_109] : memref<8x2x128xbf16, #tpu.memory_space<vmem>>, vector<1x2x64xbf16>
    %479 = vector.shape_cast %478 : vector<1x2x64xbf16> to vector<2x64xbf16>
    %480 = arith.extf %479 : vector<2x64xbf16> to vector<2x64xf32>
    %481 = vector.extract_strided_slice %470 {offsets = [0, 64], sizes = [2, 64], strides = [1, 1]} : vector<2x128xf32> to vector<2x64xf32>
    %482 = arith.addf %480, %481 : vector<2x64xf32>
    %483 = vector.extract_strided_slice %476 {offsets = [0, 0], sizes = [2, 16], strides = [1, 1]} : vector<2x64xf32> to vector<2x16xf32>
    %484 = arith.negf %483 : vector<2x16xf32>
    %485 = math.exp %484 : vector<2x16xf32>
    %cst_110 = arith.constant 1.000000e+00 : f32
    %486 = vector.broadcast %cst_110 : f32 to vector<2x16xf32>
    %487 = arith.addf %486, %485 : vector<2x16xf32>
    %488 = arith.divf %486, %487 : vector<2x16xf32>
    %489 = vector.extract_strided_slice %476 {offsets = [0, 16], sizes = [2, 16], strides = [1, 1]} : vector<2x64xf32> to vector<2x16xf32>
    %490 = arith.negf %489 : vector<2x16xf32>
    %491 = math.exp %490 : vector<2x16xf32>
    %cst_111 = arith.constant 1.000000e+00 : f32
    %492 = vector.broadcast %cst_111 : f32 to vector<2x16xf32>
    %493 = arith.addf %492, %491 : vector<2x16xf32>
    %494 = arith.divf %492, %493 : vector<2x16xf32>
    %495 = vector.extract_strided_slice %476 {offsets = [0, 32], sizes = [2, 16], strides = [1, 1]} : vector<2x64xf32> to vector<2x16xf32>
    %496 = math.tanh %495 : vector<2x16xf32>
    %497 = vector.extract_strided_slice %476 {offsets = [0, 48], sizes = [2, 16], strides = [1, 1]} : vector<2x64xf32> to vector<2x16xf32>
    %498 = arith.negf %497 : vector<2x16xf32>
    %499 = math.exp %498 : vector<2x16xf32>
    %cst_112 = arith.constant 1.000000e+00 : f32
    %500 = vector.broadcast %cst_112 : f32 to vector<2x16xf32>
    %501 = arith.addf %500, %499 : vector<2x16xf32>
    %502 = arith.divf %500, %501 : vector<2x16xf32>
    %503 = arith.mulf %494, %429 : vector<2x16xf32>
    %504 = arith.mulf %488, %496 : vector<2x16xf32>
    %505 = arith.addf %503, %504 : vector<2x16xf32>
    %506 = math.tanh %505 : vector<2x16xf32>
    %507 = arith.mulf %502, %506 : vector<2x16xf32>
    %508 = vector.extract_strided_slice %482 {offsets = [0, 0], sizes = [2, 16], strides = [1, 1]} : vector<2x64xf32> to vector<2x16xf32>
    %509 = arith.negf %508 : vector<2x16xf32>
    %510 = math.exp %509 : vector<2x16xf32>
    %cst_113 = arith.constant 1.000000e+00 : f32
    %511 = vector.broadcast %cst_113 : f32 to vector<2x16xf32>
    %512 = arith.addf %511, %510 : vector<2x16xf32>
    %513 = arith.divf %511, %512 : vector<2x16xf32>
    %514 = vector.extract_strided_slice %482 {offsets = [0, 16], sizes = [2, 16], strides = [1, 1]} : vector<2x64xf32> to vector<2x16xf32>
    %515 = arith.negf %514 : vector<2x16xf32>
    %516 = math.exp %515 : vector<2x16xf32>
    %cst_114 = arith.constant 1.000000e+00 : f32
    %517 = vector.broadcast %cst_114 : f32 to vector<2x16xf32>
    %518 = arith.addf %517, %516 : vector<2x16xf32>
    %519 = arith.divf %517, %518 : vector<2x16xf32>
    %520 = vector.extract_strided_slice %482 {offsets = [0, 32], sizes = [2, 16], strides = [1, 1]} : vector<2x64xf32> to vector<2x16xf32>
    %521 = math.tanh %520 : vector<2x16xf32>
    %522 = vector.extract_strided_slice %482 {offsets = [0, 48], sizes = [2, 16], strides = [1, 1]} : vector<2x64xf32> to vector<2x16xf32>
    %523 = arith.negf %522 : vector<2x16xf32>
    %524 = math.exp %523 : vector<2x16xf32>
    %cst_115 = arith.constant 1.000000e+00 : f32
    %525 = vector.broadcast %cst_115 : f32 to vector<2x16xf32>
    %526 = arith.addf %525, %524 : vector<2x16xf32>
    %527 = arith.divf %525, %526 : vector<2x16xf32>
    %528 = arith.mulf %519, %454 : vector<2x16xf32>
    %529 = arith.mulf %513, %521 : vector<2x16xf32>
    %530 = arith.addf %528, %529 : vector<2x16xf32>
    %531 = math.tanh %530 : vector<2x16xf32>
    %532 = arith.mulf %527, %531 : vector<2x16xf32>
    %533 = arith.truncf %507 : vector<2x16xf32> to vector<2x16xbf16>
    %534 = arith.index_cast %c6_i32 : i32 to index
    %c0_116 = arith.constant 0 : index
    %c0_117 = arith.constant 0 : index
    %535 = vector.load %arg4[%534, %c0_116, %c0_117] : memref<8x2x32xbf16, #tpu.memory_space<vmem>>, vector<1x2x16xbf16>
    %536 = vector.shape_cast %535 : vector<1x2x16xbf16> to vector<2x16xbf16>
    %537 = vector.shape_cast %533 : vector<2x16xbf16> to vector<1x2x16xbf16>
    tpu.vector_store %arg4[%534, %c0_116, %c0_117], %537 {strides = array<i32>} : memref<8x2x32xbf16, #tpu.memory_space<vmem>>, vector<1x2x16xbf16>,
    %538 = arith.truncf %532 : vector<2x16xf32> to vector<2x16xbf16>
    %539 = arith.index_cast %467 : i32 to index
    %c0_118 = arith.constant 0 : index
    %c16_119 = arith.constant 16 : index
    %540 = vector.load %arg4[%539, %c0_118, %c16_119] : memref<8x2x32xbf16, #tpu.memory_space<vmem>>, vector<1x2x16xbf16>
    %541 = vector.shape_cast %540 : vector<1x2x16xbf16> to vector<2x16xbf16>
    %542 = vector.shape_cast %538 : vector<2x16xbf16> to vector<1x2x16xbf16>
    tpu.vector_store %arg4[%539, %c0_118, %c16_119], %542 {strides = array<i32>} : memref<8x2x32xbf16, #tpu.memory_space<vmem>>, vector<1x2x16xbf16>,
    %c7_i32_120 = arith.constant 7 : i32
    %c7_i32_121 = arith.constant 7 : i32
    %543 = arith.subi %c7_i32_121, %c7_i32_120 : i32
    %544 = tpu.concatenate %507, %532 in 1 : vector<2x16xf32>, vector<2x16xf32> -> vector<2x32xf32>
    %545 = arith.truncf %544 : vector<2x32xf32> to vector<2x32xbf16>
    %cst_122 = arith.constant dense<0.000000e+00> : vector<2x128xf32>
    %546 = tpu.matmul %545, %9, %cst_122 {dimension_numbers = #tpu.dot_dimension_numbers<[1], [0], [0], [1], [0, 0, 1, 1], [], []>} : vector<2x32xbf16>, vector<32x128xbf16>, vector<2x128xf32> -> vector<2x128xf32>
    %547 = arith.index_cast %c7_i32_120 : i32 to index
    %c0_123 = arith.constant 0 : index
    %c0_124 = arith.constant 0 : index
    %548 = vector.load %arg5[%547, %c0_123, %c0_124] : memref<8x2x128xbf16, #tpu.memory_space<vmem>>, vector<1x2x64xbf16>
    %549 = vector.shape_cast %548 : vector<1x2x64xbf16> to vector<2x64xbf16>
    %550 = arith.extf %549 : vector<2x64xbf16> to vector<2x64xf32>
    %551 = vector.extract_strided_slice %546 {offsets = [0, 0], sizes = [2, 64], strides = [1, 1]} : vector<2x128xf32> to vector<2x64xf32>
    %552 = arith.addf %550, %551 : vector<2x64xf32>
    %553 = arith.index_cast %543 : i32 to index
    %c0_125 = arith.constant 0 : index
    %c64_126 = arith.constant 64 : index
    %554 = vector.load %arg5[%553, %c0_125, %c64_126] : memref<8x2x128xbf16, #tpu.memory_space<vmem>>, vector<1x2x64xbf16>
    %555 = vector.shape_cast %554 : vector<1x2x64xbf16> to vector<2x64xbf16>
    %556 = arith.extf %555 : vector<2x64xbf16> to vector<2x64xf32>
    %557 = vector.extract_strided_slice %546 {offsets = [0, 64], sizes = [2, 64], strides = [1, 1]} : vector<2x128xf32> to vector<2x64xf32>
    %558 = arith.addf %556, %557 : vector<2x64xf32>
    %559 = vector.extract_strided_slice %552 {offsets = [0, 0], sizes = [2, 16], strides = [1, 1]} : vector<2x64xf32> to vector<2x16xf32>
    %560 = arith.negf %559 : vector<2x16xf32>
    %561 = math.exp %560 : vector<2x16xf32>
    %cst_127 = arith.constant 1.000000e+00 : f32
    %562 = vector.broadcast %cst_127 : f32 to vector<2x16xf32>
    %563 = arith.addf %562, %561 : vector<2x16xf32>
    %564 = arith.divf %562, %563 : vector<2x16xf32>
    %565 = vector.extract_strided_slice %552 {offsets = [0, 16], sizes = [2, 16], strides = [1, 1]} : vector<2x64xf32> to vector<2x16xf32>
    %566 = arith.negf %565 : vector<2x16xf32>
    %567 = math.exp %566 : vector<2x16xf32>
    %cst_128 = arith.constant 1.000000e+00 : f32
    %568 = vector.broadcast %cst_128 : f32 to vector<2x16xf32>
    %569 = arith.addf %568, %567 : vector<2x16xf32>
    %570 = arith.divf %568, %569 : vector<2x16xf32>
    %571 = vector.extract_strided_slice %552 {offsets = [0, 32], sizes = [2, 16], strides = [1, 1]} : vector<2x64xf32> to vector<2x16xf32>
    %572 = math.tanh %571 : vector<2x16xf32>
    %573 = vector.extract_strided_slice %552 {offsets = [0, 48], sizes = [2, 16], strides = [1, 1]} : vector<2x64xf32> to vector<2x16xf32>
    %574 = arith.negf %573 : vector<2x16xf32>
    %575 = math.exp %574 : vector<2x16xf32>
    %cst_129 = arith.constant 1.000000e+00 : f32
    %576 = vector.broadcast %cst_129 : f32 to vector<2x16xf32>
    %577 = arith.addf %576, %575 : vector<2x16xf32>
    %578 = arith.divf %576, %577 : vector<2x16xf32>
    %579 = arith.mulf %570, %505 : vector<2x16xf32>
    %580 = arith.mulf %564, %572 : vector<2x16xf32>
    %581 = arith.addf %579, %580 : vector<2x16xf32>
    %582 = math.tanh %581 : vector<2x16xf32>
    %583 = arith.mulf %578, %582 : vector<2x16xf32>
    %584 = vector.extract_strided_slice %558 {offsets = [0, 0], sizes = [2, 16], strides = [1, 1]} : vector<2x64xf32> to vector<2x16xf32>
    %585 = arith.negf %584 : vector<2x16xf32>
    %586 = math.exp %585 : vector<2x16xf32>
    %cst_130 = arith.constant 1.000000e+00 : f32
    %587 = vector.broadcast %cst_130 : f32 to vector<2x16xf32>
    %588 = arith.addf %587, %586 : vector<2x16xf32>
    %589 = arith.divf %587, %588 : vector<2x16xf32>
    %590 = vector.extract_strided_slice %558 {offsets = [0, 16], sizes = [2, 16], strides = [1, 1]} : vector<2x64xf32> to vector<2x16xf32>
    %591 = arith.negf %590 : vector<2x16xf32>
    %592 = math.exp %591 : vector<2x16xf32>
    %cst_131 = arith.constant 1.000000e+00 : f32
    %593 = vector.broadcast %cst_131 : f32 to vector<2x16xf32>
    %594 = arith.addf %593, %592 : vector<2x16xf32>
    %595 = arith.divf %593, %594 : vector<2x16xf32>
    %596 = vector.extract_strided_slice %558 {offsets = [0, 32], sizes = [2, 16], strides = [1, 1]} : vector<2x64xf32> to vector<2x16xf32>
    %597 = math.tanh %596 : vector<2x16xf32>
    %598 = vector.extract_strided_slice %558 {offsets = [0, 48], sizes = [2, 16], strides = [1, 1]} : vector<2x64xf32> to vector<2x16xf32>
    %599 = arith.negf %598 : vector<2x16xf32>
    %600 = math.exp %599 : vector<2x16xf32>
    %cst_132 = arith.constant 1.000000e+00 : f32
    %601 = vector.broadcast %cst_132 : f32 to vector<2x16xf32>
    %602 = arith.addf %601, %600 : vector<2x16xf32>
    %603 = arith.divf %601, %602 : vector<2x16xf32>
    %604 = arith.mulf %595, %530 : vector<2x16xf32>
    %605 = arith.mulf %589, %597 : vector<2x16xf32>
    %606 = arith.addf %604, %605 : vector<2x16xf32>
    %607 = math.tanh %606 : vector<2x16xf32>
    %608 = arith.mulf %603, %607 : vector<2x16xf32>
    %609 = arith.truncf %583 : vector<2x16xf32> to vector<2x16xbf16>
    %610 = arith.index_cast %c7_i32_120 : i32 to index
    %c0_133 = arith.constant 0 : index
    %c0_134 = arith.constant 0 : index
    %611 = vector.load %arg4[%610, %c0_133, %c0_134] : memref<8x2x32xbf16, #tpu.memory_space<vmem>>, vector<1x2x16xbf16>
    %612 = vector.shape_cast %611 : vector<1x2x16xbf16> to vector<2x16xbf16>
    %613 = vector.shape_cast %609 : vector<2x16xbf16> to vector<1x2x16xbf16>
    tpu.vector_store %arg4[%610, %c0_133, %c0_134], %613 {strides = array<i32>} : memref<8x2x32xbf16, #tpu.memory_space<vmem>>, vector<1x2x16xbf16>,
    %614 = arith.truncf %608 : vector<2x16xf32> to vector<2x16xbf16>
    %615 = arith.index_cast %543 : i32 to index
    %c0_135 = arith.constant 0 : index
    %c16_136 = arith.constant 16 : index
    %616 = vector.load %arg4[%615, %c0_135, %c16_136] : memref<8x2x32xbf16, #tpu.memory_space<vmem>>, vector<1x2x16xbf16>
    %617 = vector.shape_cast %616 : vector<1x2x16xbf16> to vector<2x16xbf16>
    %618 = vector.shape_cast %614 : vector<2x16xbf16> to vector<1x2x16xbf16>
    tpu.vector_store %arg4[%615, %c0_135, %c16_136], %618 {strides = array<i32>} : memref<8x2x32xbf16, #tpu.memory_space<vmem>>, vector<1x2x16xbf16>,
    %c8_i32 = arith.constant 8 : i32
    return
  }
}

</mosaic_0001>

<llo_original>
// kernel: tpu_custom_call.1
$region0: #{tpu_custom_call.1}
  #allocation0 [shape = 'u32[]', space=smem, size = 0x4, offset = 0x4, fixed_abs, tag = 'smem constant byte address 0x4 - core index']
  #allocation1 [shape = 'u32[144,128]{1,0:T(1,128)}', space=vmem, size = 0x12000, scoped, tag = 'internal scratch']
  #allocation2 [shape = 'bf16[8,2,128]{2,1,0:T(2,128)(2,1)}', space=vmem, size = 0x1000, scoped, tag = 'scratch operand']
  %s0 = inlined_call_operand.hbm [shape: bf16[16,32], index: 0, kind: input, shape index: {}]
  %s1 = inlined_call_operand.hbm [shape: bf16[32,128], index: 1, kind: input, shape index: {}]
  %s2 = inlined_call_operand.hbm [shape: bf16[32,128], index: 2, kind: input, shape index: {}]
  %s3 = inlined_call_operand.vmem [shape: f32[1,128], index: 3, kind: input, shape index: {}]
  %s4 = inlined_call_operand.hbm [shape: bf16[8,2,32], index: 4, kind: output, shape index: {}]
  %s5 = sld [smem:[#allocation0]]
  $region38: #{tpu_custom_call.1} parent=0
    _
  %s7 = ssub.s32 1, %s5
  %s8 = scalar_select 0, %s7, %s5
  $region1: #{tpu_custom_call.1} parent=0
    #allocation3 [shape = 'u8[4096]{0}', space=vmem, size = 0x1000, scoped, tag = 'input window, operand 0, single buffered']
    #allocation4 [shape = 's32[1]{0}', space=sflag, size = 0x4, scoped, tag = 'scoped memory for tpu_custom_call.1']
    #allocation5 [shape = 's32[1]{0}', space=sflag, size = 0x4, scoped, tag = 'scoped memory for tpu_custom_call.1']
    #allocation6 [shape = 'u8[8192]{0}', space=vmem, size = 0x2000, scoped, tag = 'input window, operand 1, single buffered']
    #allocation7 [shape = 's32[1]{0}', space=sflag, size = 0x4, scoped, tag = 'scoped memory for tpu_custom_call.1']
    #allocation8 [shape = 'u8[8192]{0}', space=vmem, size = 0x2000, scoped, tag = 'input window, operand 2, single buffered']
    #allocation9 [shape = 'u8[4096]{0}', space=vmem, size = 0x1000, scoped, tag = 'output window, operand 0, single buffered']
    %9 = vsyncpa [#allocation4], 0
    %10 = vsyncpa [#allocation7], 0
    %11 = vsyncpa [#allocation5], 0
    // Predicated region
    $region2: #{tpu_custom_call.1} parent=1 // pred_check
      _
    $region3: #{tpu_custom_call.1} parent=1 // pred_check_branch
      %13 = sbr.rel (0) target = $region5
    $region4: #{tpu_custom_call.1} parent=1 // pred_region
      %s15 = ssub.s32 128, 128
      %16 = vsyncadd [#allocation4], %s15
      %s17 = sshll.u32 [#allocation3], 4
      %s18 = int_to_ptr.vmem [resolvable:$true] %s17
      %23 = dma.hbm_to_vmem [thread:$0]  %s0, 128, %s18, [#allocation4], 64, 64, 4
    $region5: #{tpu_custom_call.1} parent=1 // pred_fallthru
      _
    // Predicated region
    $region6: #{tpu_custom_call.1} parent=1 // pred_check
      _
    $region7: #{tpu_custom_call.1} parent=1 // pred_check_branch
      %25 = sbr.rel (0) target = $region9
    $region8: #{tpu_custom_call.1} parent=1 // pred_region
      %s27 = ssub.s32 256, 256
      %28 = vsyncadd [#allocation7], %s27
      %s29 = sshll.u32 [#allocation6], 4
      %s30 = int_to_ptr.vmem [resolvable:$true] %s29
      %35 = dma.hbm_to_vmem [thread:$0]  %s1, 256, %s30, [#allocation7], 64, 64, 4
    $region9: #{tpu_custom_call.1} parent=1 // pred_fallthru
      _
    // Predicated region
    $region10: #{tpu_custom_call.1} parent=1 // pred_check
      _
    $region11: #{tpu_custom_call.1} parent=1 // pred_check_branch
      %37 = sbr.rel (0) target = $region13
    $region12: #{tpu_custom_call.1} parent=1 // pred_region
      %s39 = ssub.s32 256, 256
      %40 = vsyncadd [#allocation7], %s39
      %s41 = sshll.u32 [#allocation8], 4
      %s42 = int_to_ptr.vmem [resolvable:$true] %s41
      %47 = dma.hbm_to_vmem [thread:$0]  %s2, 256, %s42, [#allocation7], 64, 64, 4
    $region13: #{tpu_custom_call.1} parent=1 // pred_fallthru
      _
    // Predicated region
    $region14: #{tpu_custom_call.1} parent=1 // pred_check
      _
    $region15: #{tpu_custom_call.1} parent=1 // pred_check_branch
      %49 = sbr.rel (0) target = $region17
    $region16: #{tpu_custom_call.1} parent=1 // pred_region
      _
    $region17: #{tpu_custom_call.1} parent=1 // pred_fallthru
      _
    // Predicated region
    $region18: #{tpu_custom_call.1} parent=1 // pred_check
      _
    $region19: #{tpu_custom_call.1} parent=1 // pred_check_branch
      %51 = sbr.rel (0) target = $region21
    $region20: #{tpu_custom_call.1} parent=1 // pred_region
      %52 = dma.done [#allocation4], 128
    $region21: #{tpu_custom_call.1} parent=1 // pred_fallthru
      _
    // Predicated region
    $region22: #{tpu_custom_call.1} parent=1 // pred_check
      _
    $region23: #{tpu_custom_call.1} parent=1 // pred_check_branch
      %54 = sbr.rel (0) target = $region25
    $region24: #{tpu_custom_call.1} parent=1 // pred_region
      %55 = dma.done [#allocation7], 256
    $region25: #{tpu_custom_call.1} parent=1 // pred_fallthru
      _
    // Predicated region
    $region26: #{tpu_custom_call.1} parent=1 // pred_check
      _
    $region27: #{tpu_custom_call.1} parent=1 // pred_check_branch
      %57 = sbr.rel (0) target = $region29
    $region28: #{tpu_custom_call.1} parent=1 // pred_region
      %58 = dma.done [#allocation7], 256
    $region29: #{tpu_custom_call.1} parent=1 // pred_fallthru
      _
    %v60 = vld [vmem:[#allocation3] sm:$0xf]
    %v61 = vld [vmem:[#allocation3 + $0x4] sm:$0xf]
    %v62 = vld [vmem:[#allocation6] sm:$0xf]
    %v63 = vld [vmem:[#allocation6 + $0x4] sm:$0xf]
    %v64 = vld [vmem:[#allocation6 + $0x8] sm:$0xf]
    %v65 = vld [vmem:[#allocation6 + $0xc] sm:$0xf]
    %v66 = vld [vmem:[%s3] sm:$0x1]
    %v68 = vlaneseq
    %v69 = vshrl.u32 %v68, 7
    %v70 = vsub.s32 0, %v69
    %v71 = vrot.slane %v66, %v70
    %v75 = vunpack.c.l.b16 %v60
    %v76 = vunpack.c.l.b16 %v61
    %v77 = vpack.c.b16 %v76, %v75
    %v82 = vunpack.c.l.b16 %v62
    %v83 = vunpack.c.l.b16 %v63
    %v84 = vunpack.c.l.b16 %v64
    %v85 = vunpack.c.l.b16 %v65
    %v86 = vpack.c.b16 %v83, %v82
    %v87 = vpack.c.b16 %v85, %v84
    %vm90 = vcmask 261120
    %v92 = vsel %vm90, %v77, 0
    %94 = vmatprep.subr.bf16.mxu0 0
    %95 = vmatpush1.bf16.msra.mxu0 %v86
    %96 = vmatprep.subr.bf16.mxu0 0
    %97 = vmatpush1.bf16.msra.mxu0 %v87
    %98 = vmatprep.subr.bf16.mxu0 0
    %99 = vmatpush1.bf16.msra.mxu0 0
    %100 = vmatprep.subr.bf16.mxu0 0
    %101 = vmatpush1.bf16.msra.mxu0 0
    %102 = vmatprep.subr.bf16.mxu0 0
    %103 = vmatpush1.bf16.msra.mxu0 0
    %104 = vmatprep.subr.bf16.mxu0 0
    %105 = vmatpush1.bf16.msra.mxu0 0
    %106 = vmatprep.subr.bf16.mxu0 0
    %107 = vmatpush1.bf16.msra.mxu0 0
    %108 = vmatprep.subr.bf16.mxu0 0
    %109 = vmatpush1.bf16.msra.mxu0 0
    %110 = vmatprep.subr.bf16.mxu0 0
    %111 = vmatpush1.bf16.msra.mxu0 0
    %112 = vmatprep.subr.bf16.mxu0 0
    %113 = vmatpush1.bf16.msra.mxu0 0
    %114 = vmatprep.subr.bf16.mxu0 0
    %115 = vmatpush1.bf16.msra.mxu0 0
    %116 = vmatprep.subr.bf16.mxu0 0
    %117 = vmatpush1.bf16.msra.mxu0 0
    %118 = vmatprep.subr.bf16.mxu0 0
    %119 = vmatpush1.bf16.msra.mxu0 0
    %120 = vmatprep.subr.bf16.mxu0 0
    %121 = vmatpush1.bf16.msra.mxu0 0
    %122 = vmatprep.subr.bf16.mxu0 0
    %123 = vmatpush1.bf16.msra.mxu0 0
    %124 = vmatprep.subr.bf16.mxu0 0
    %125 = vmatpush1.bf16.msra.mxu0 0
    %126 = vmatprep.mubr.bf16.mxu0 0
    %127 = vmatmul.mubr.bf16.gmra.mrb[0].mxu0 %v92
    %v128 = vpop.f32.mrb[0].mxu0
    %v129 = vadd.f32 %v71, %v128
    %v130 = vpop.f32.mrb[0].mxu0
    %v131 = vpop.f32.mrb[0].mxu0
    %v132 = vadd.f32 %v71, %v131
    %v133 = vpop.f32.mrb[0].mxu0
    %134 = vdwg.mxu0
    %v137 = vcombine.high %v129, %v129
    %v139 = vunpack.c.l.s4 1983009808
    %v140 = vunpack.c.0.s8 %v139
    %v141 = vlaneseq
    %v142 = vshrl.u32 %v141, 7
    %v143 = vsub.s32 %v140, %v142
    %v144 = vrot.slane %v129, %v143
    %v146 = vunpack.c.l.s4 1983009808
    %v147 = vunpack.c.0.s8 %v146
    %v148 = vlaneseq
    %v149 = vshrl.u32 %v148, 7
    %v150 = vsub.s32 %v147, %v149
    %v151 = vrot.slane %v137, %v150
    %v152 = vcombine.high %v144, %v144
    %v153 = vcombine.high %v151, %v151
    %v154 = vcombine.high %v132, %v132
    %v156 = vunpack.c.l.s4 1983009808
    %v157 = vunpack.c.0.s8 %v156
    %v158 = vlaneseq
    %v159 = vshrl.u32 %v158, 7
    %v160 = vsub.s32 %v157, %v159
    %v161 = vrot.slane %v132, %v160
    %v163 = vunpack.c.l.s4 1983009808
    %v164 = vunpack.c.0.s8 %v163
    %v165 = vlaneseq
    %v166 = vshrl.u32 %v165, 7
    %v167 = vsub.s32 %v164, %v166
    %v168 = vrot.slane %v154, %v167
    %v169 = vcombine.high %v161, %v161
    %v170 = vcombine.high %v168, %v168
    %v179 = vpack.c.bf16 %v144, %v144
    %v180 = vpack.c.bf16 %v152, %v152
    %v181 = vpack.c.bf16 %v151, %v151
    %v182 = vpack.c.bf16 %v153, %v153
    %v183 = vpack.c.bf16 %v161, %v161
    %v184 = vpack.c.bf16 %v169, %v169
    %v185 = vpack.c.bf16 %v168, %v168
    %v186 = vpack.c.bf16 %v170, %v170
    %187 = vst [vmem:[#allocation2] sm:$0x1] %v179
    %188 = vst [vmem:[#allocation2 + $0x1] sm:$0x1] %v180
    %189 = vst [vmem:[#allocation2 + $0x2] sm:$0x1] %v181
    %190 = vst [vmem:[#allocation2 + $0x3] sm:$0x1] %v182
    %191 = vst [vmem:[#allocation2 + $0x4] sm:$0x1] %v183
    %192 = vst [vmem:[#allocation2 + $0x5] sm:$0x1] %v184
    %193 = vst [vmem:[#allocation2 + $0x6] sm:$0x1] %v185
    %194 = vst [vmem:[#allocation2 + $0x7] sm:$0x1] %v186
    %v195 = vld [vmem:[#allocation8] sm:$0xf]
    %v196 = vld [vmem:[#allocation8 + $0x4] sm:$0xf]
    %v197 = vld [vmem:[#allocation8 + $0x8] sm:$0xf]
    %v198 = vld [vmem:[#allocation8 + $0xc] sm:$0xf]
    %v199 = vpack.c.bf16 0.0, 0.0
    %v204 = vunpack.c.l.b16 %v195
    %v205 = vunpack.c.l.b16 %v196
    %v206 = vunpack.c.l.b16 %v197
    %v207 = vunpack.c.l.b16 %v198
    %v208 = vpack.c.b16 %v205, %v204
    %v209 = vpack.c.b16 %v207, %v206
    %v213 = vsel %vm90, %v199, 0
    %215 = vmatprep.subr.bf16.mxu0 0
    %216 = vmatpush1.bf16.msra.mxu0 %v208
    %217 = vmatprep.subr.bf16.mxu0 0
    %218 = vmatpush1.bf16.msra.mxu0 %v209
    %219 = vmatprep.subr.bf16.mxu0 0
    %220 = vmatpush1.bf16.msra.mxu0 0
    %221 = vmatprep.subr.bf16.mxu0 0
    %222 = vmatpush1.bf16.msra.mxu0 0
    %223 = vmatprep.subr.bf16.mxu0 0
    %224 = vmatpush1.bf16.msra.mxu0 0
    %225 = vmatprep.subr.bf16.mxu0 0
    %226 = vmatpush1.bf16.msra.mxu0 0
    %227 = vmatprep.subr.bf16.mxu0 0
    %228 = vmatpush1.bf16.msra.mxu0 0
    %229 = vmatprep.subr.bf16.mxu0 0
    %230 = vmatpush1.bf16.msra.mxu0 0
    %231 = vmatprep.subr.bf16.mxu0 0
    %232 = vmatpush1.bf16.msra.mxu0 0
    %233 = vmatprep.subr.bf16.mxu0 0
    %234 = vmatpush1.bf16.msra.mxu0 0
    %235 = vmatprep.subr.bf16.mxu0 0
    %236 = vmatpush1.bf16.msra.mxu0 0
    %237 = vmatprep.subr.bf16.mxu0 0
    %238 = vmatpush1.bf16.msra.mxu0 0
    %239 = vmatprep.subr.bf16.mxu0 0
    %240 = vmatpush1.bf16.msra.mxu0 0
    %241 = vmatprep.subr.bf16.mxu0 0
    %242 = vmatpush1.bf16.msra.mxu0 0
    %243 = vmatprep.subr.bf16.mxu0 0
    %244 = vmatpush1.bf16.msra.mxu0 0
    %245 = vmatprep.subr.bf16.mxu0 0
    %246 = vmatpush1.bf16.msra.mxu0 0
    %247 = vmatprep.mubr.bf16.mxu0 0
    %248 = vmatmul.mubr.bf16.gmra.mrb[0].mxu0 %v213
    %v249 = vpop.f32.mrb[0].mxu0
    %v250 = vadd.f32 0.0, %v249
    %v251 = vpop.f32.mrb[0].mxu0
    %v252 = vpop.f32.mrb[0].mxu0
    %v253 = vpop.f32.mrb[0].mxu0
    %254 = vdwg.mxu0
    %v255 = vld [vmem:[#allocation2] sm:$0x1]
    %v256 = vunpack.c.l.bf16 %v255
    %v257 = vadd.f32 %v256, %v250
    %s258 = scalar_lea.vmem [#allocation2], 7
    %v259 = vld [vmem:[%s258] sm:$0x1]
    %v260 = vunpack.c.l.bf16 %v259
    %v261 = vadd.f32 %v260, %v250
    %v262 = vxor.u32 %v257, 2147483648
    %v263 = vmul.f32 %v262, 1.442695
    %v264 = vpow.pop %v263
    %v265 = vadd.f32 %v264, 1.0
    %v266 = vrcp.pop %v265
    %v267 = vmul.f32 1.0, %v266
    %v268 = vtanh.pop %v257
    %v269 = vmul.f32 %v267, 0.0
    %271 = vrot.lane.b32.xlu0 %v268, 96
    %v272 = vpop.permute.xlu0 %271
    %v274 = vmul.f32 %v267, %v272
    %276 = vrot.lane.b32.xlu0 %v274, 16
    %v277 = vpop.permute.xlu0 %276
    %v279 = vadd.f32 %v269, %v277
    %v280 = vtanh.pop %v279
    %282 = vrot.lane.b32.xlu0 %v280, 32
    %v283 = vpop.permute.xlu0 %282
    %v285 = vmul.f32 %v267, %v283
    %v286 = vxor.u32 %v261, 2147483648
    %v287 = vmul.f32 %v286, 1.442695
    %v288 = vpow.pop %v287
    %v289 = vadd.f32 %v288, 1.0
    %v290 = vrcp.pop %v289
    %v291 = vmul.f32 1.0, %v290
    %v292 = vtanh.pop %v261
    %v293 = vmul.f32 %v291, 0.0
    %295 = vrot.lane.b32.xlu0 %v292, 96
    %v296 = vpop.permute.xlu0 %295
    %v298 = vmul.f32 %v291, %v296
    %300 = vrot.lane.b32.xlu0 %v298, 16
    %v301 = vpop.permute.xlu0 %300
    %v303 = vadd.f32 %v293, %v301
    %v304 = vtanh.pop %v303
    %306 = vrot.lane.b32.xlu0 %v304, 32
    %v307 = vpop.permute.xlu0 %306
    %v309 = vmul.f32 %v291, %v307
    %v310 = vpack.c.bf16 %v285, %v285
    %v313 = vunpack.c.l.s4 1966171168
    %v314 = vunpack.c.0.s8 %v313
    %v315 = vlaneseq
    %v316 = vshrl.u32 %v315, 7
    %v317 = vsub.s32 %v314, %v316
    %v318 = vrot.slane %v310, %v317
    %v320 = vunpack.c.l.s4 1966171168
    %v321 = vunpack.c.0.s8 %v320
    %v322 = vlaneseq
    %v323 = vshrl.u32 %v322, 7
    %v324 = vsub.s32 %v321, %v323
    %v325 = vrot.slane %v318, %v324
    %326 = vrot.lane.b32.xlu0 %v325, 80
    %v327 = vpop.permute.xlu0 %326
    %vm329 = vcmask 122880
    %330 = vst.msk [vmem:[#allocation9] sm:$0x1] %vm329, %v327
    %v331 = vpack.c.bf16 %v309, %v309
    %v334 = vunpack.c.l.s4 1966171168
    %v335 = vunpack.c.0.s8 %v334
    %v336 = vlaneseq
    %v337 = vshrl.u32 %v336, 7
    %v338 = vsub.s32 %v335, %v337
    %v339 = vrot.slane %v331, %v338
    %v341 = vunpack.c.l.s4 1966171168
    %v342 = vunpack.c.0.s8 %v341
    %v343 = vlaneseq
    %v344 = vshrl.u32 %v343, 7
    %v345 = vsub.s32 %v342, %v344
    %v346 = vrot.slane %v339, %v345
    %347 = vrot.lane.b32.xlu0 %v346, 32
    %v348 = vpop.permute.xlu0 %347
    %s350 = scalar_lea.vmem [#allocation9], 7
    %vm351 = vcmask 254080
    %352 = vst.msk [vmem:[%s350] sm:$0x1] %vm351, %v348
    %v355 = vunpack.c.l.s4 1983009808
    %v356 = vunpack.c.0.s8 %v355
    %v357 = vlaneseq
    %v358 = vshrl.u32 %v357, 7
    %v359 = vsub.s32 %v356, %v358
    %v360 = vrot.slane %v285, %v359
    %361 = vrot.lane.b32.xlu0 %v360, 80
    %v362 = vpop.permute.xlu0 %361
    %v366 = vunpack.c.l.s4 1983009808
    %v367 = vunpack.c.0.s8 %v366
    %v368 = vlaneseq
    %v369 = vshrl.u32 %v368, 7
    %v370 = vsub.s32 %v367, %v369
    %v371 = vrot.slane %v309, %v370
    %372 = vrot.lane.b32.xlu0 %v371, 32
    %v373 = vpop.permute.xlu0 %372
    %vm375 = vcmask 130048
    %v376 = vsel %vm375, %v362, %v373
    %v377 = vpack.c.bf16 %v376, %v376
    %v379 = vsel %vm90, %v377, 0
    %381 = vmatprep.subr.bf16.mxu0 0
    %382 = vmatpush1.bf16.msra.mxu0 %v208
    %383 = vmatprep.subr.bf16.mxu0 0
    %384 = vmatpush1.bf16.msra.mxu0 %v209
    %385 = vmatprep.subr.bf16.mxu0 0
    %386 = vmatpush1.bf16.msra.mxu0 0
    %387 = vmatprep.subr.bf16.mxu0 0
    %388 = vmatpush1.bf16.msra.mxu0 0
    %389 = vmatprep.subr.bf16.mxu0 0
    %390 = vmatpush1.bf16.msra.mxu0 0
    %391 = vmatprep.subr.bf16.mxu0 0
    %392 = vmatpush1.bf16.msra.mxu0 0
    %393 = vmatprep.subr.bf16.mxu0 0
    %394 = vmatpush1.bf16.msra.mxu0 0
    %395 = vmatprep.subr.bf16.mxu0 0
    %396 = vmatpush1.bf16.msra.mxu0 0
    %397 = vmatprep.subr.bf16.mxu0 0
    %398 = vmatpush1.bf16.msra.mxu0 0
    %399 = vmatprep.subr.bf16.mxu0 0
    %400 = vmatpush1.bf16.msra.mxu0 0
    %401 = vmatprep.subr.bf16.mxu0 0
    %402 = vmatpush1.bf16.msra.mxu0 0
    %403 = vmatprep.subr.bf16.mxu0 0
    %404 = vmatpush1.bf16.msra.mxu0 0
    %405 = vmatprep.subr.bf16.mxu0 0
    %406 = vmatpush1.bf16.msra.mxu0 0
    %407 = vmatprep.subr.bf16.mxu0 0
    %408 = vmatpush1.bf16.msra.mxu0 0
    %409 = vmatprep.subr.bf16.mxu0 0
    %410 = vmatpush1.bf16.msra.mxu0 0
    %411 = vmatprep.subr.bf16.mxu0 0
    %412 = vmatpush1.bf16.msra.mxu0 0
    %413 = vmatprep.mubr.bf16.mxu0 0
    %414 = vmatmul.mubr.bf16.gmra.mrb[0].mxu0 %v379
    %v415 = vpop.f32.mrb[0].mxu0
    %v416 = vadd.f32 0.0, %v415
    %v417 = vpop.f32.mrb[0].mxu0
    %v418 = vpop.f32.mrb[0].mxu0
    %v419 = vpop.f32.mrb[0].mxu0
    %420 = vdwg.mxu0
    %s421 = scalar_lea.vmem [#allocation2], 1
    %v422 = vld [vmem:[%s421] sm:$0x1]
    %v423 = vunpack.c.l.bf16 %v422
    %v424 = vadd.f32 %v423, %v416
    %s425 = scalar_lea.vmem [#allocation2], 6
    %v426 = vld [vmem:[%s425] sm:$0x1]
    %v427 = vunpack.c.l.bf16 %v426
    %v428 = vadd.f32 %v427, %v416
    %v429 = vxor.u32 %v424, 2147483648
    %v430 = vmul.f32 %v429, 1.442695
    %v431 = vpow.pop %v430
    %v432 = vadd.f32 %v431, 1.0
    %v433 = vrcp.pop %v432
    %v434 = vmul.f32 1.0, %v433
    %v435 = vtanh.pop %v424
    %v436 = vmul.f32 %v434, %v279
    %438 = vrot.lane.b32.xlu0 %v435, 96
    %v439 = vpop.permute.xlu0 %438
    %v441 = vmul.f32 %v434, %v439
    %443 = vrot.lane.b32.xlu0 %v441, 16
    %v444 = vpop.permute.xlu0 %443
    %v446 = vadd.f32 %v436, %v444
    %v447 = vtanh.pop %v446
    %449 = vrot.lane.b32.xlu0 %v447, 32
    %v450 = vpop.permute.xlu0 %449
    %v452 = vmul.f32 %v434, %v450
    %v453 = vxor.u32 %v428, 2147483648
    %v454 = vmul.f32 %v453, 1.442695
    %v455 = vpow.pop %v454
    %v456 = vadd.f32 %v455, 1.0
    %v457 = vrcp.pop %v456
    %v458 = vmul.f32 1.0, %v457
    %v459 = vtanh.pop %v428
    %v460 = vmul.f32 %v458, %v303
    %462 = vrot.lane.b32.xlu0 %v459, 96
    %v463 = vpop.permute.xlu0 %462
    %v465 = vmul.f32 %v458, %v463
    %467 = vrot.lane.b32.xlu0 %v465, 16
    %v468 = vpop.permute.xlu0 %467
    %v470 = vadd.f32 %v460, %v468
    %v471 = vtanh.pop %v470
    %473 = vrot.lane.b32.xlu0 %v471, 32
    %v474 = vpop.permute.xlu0 %473
    %v476 = vmul.f32 %v458, %v474
    %v477 = vpack.c.bf16 %v452, %v452
    %v480 = vunpack.c.l.s4 1966171168
    %v481 = vunpack.c.0.s8 %v480
    %v482 = vlaneseq
    %v483 = vshrl.u32 %v482, 7
    %v484 = vsub.s32 %v481, %v483
    %v485 = vrot.slane %v477, %v484
    %v487 = vunpack.c.l.s4 1966171168
    %v488 = vunpack.c.0.s8 %v487
    %v489 = vlaneseq
    %v490 = vshrl.u32 %v489, 7
    %v491 = vsub.s32 %v488, %v490
    %v492 = vrot.slane %v485, %v491
    %493 = vrot.lane.b32.xlu0 %v492, 80
    %v494 = vpop.permute.xlu0 %493
    %s496 = scalar_lea.vmem [#allocation9], 1
    %497 = vst.msk [vmem:[%s496] sm:$0x1] %vm329, %v494
    %v498 = vpack.c.bf16 %v476, %v476
    %v501 = vunpack.c.l.s4 1966171168
    %v502 = vunpack.c.0.s8 %v501
    %v503 = vlaneseq
    %v504 = vshrl.u32 %v503, 7
    %v505 = vsub.s32 %v502, %v504
    %v506 = vrot.slane %v498, %v505
    %v508 = vunpack.c.l.s4 1966171168
    %v509 = vunpack.c.0.s8 %v508
    %v510 = vlaneseq
    %v511 = vshrl.u32 %v510, 7
    %v512 = vsub.s32 %v509, %v511
    %v513 = vrot.slane %v506, %v512
    %514 = vrot.lane.b32.xlu0 %v513, 32
    %v515 = vpop.permute.xlu0 %514
    %s517 = scalar_lea.vmem [#allocation9], 6
    %518 = vst.msk [vmem:[%s517] sm:$0x1] %vm351, %v515
    %v521 = vunpack.c.l.s4 1983009808
    %v522 = vunpack.c.0.s8 %v521
    %v523 = vlaneseq
    %v524 = vshrl.u32 %v523, 7
    %v525 = vsub.s32 %v522, %v524
    %v526 = vrot.slane %v452, %v525
    %527 = vrot.lane.b32.xlu0 %v526, 80
    %v528 = vpop.permute.xlu0 %527
    %v532 = vunpack.c.l.s4 1983009808
    %v533 = vunpack.c.0.s8 %v532
    %v534 = vlaneseq
    %v535 = vshrl.u32 %v534, 7
    %v536 = vsub.s32 %v533, %v535
    %v537 = vrot.slane %v476, %v536
    %538 = vrot.lane.b32.xlu0 %v537, 32
    %v539 = vpop.permute.xlu0 %538
    %v541 = vsel %vm375, %v528, %v539
    %v542 = vpack.c.bf16 %v541, %v541
    %v544 = vsel %vm90, %v542, 0
    %546 = vmatprep.subr.bf16.mxu0 0
    %547 = vmatpush1.bf16.msra.mxu0 %v208
    %548 = vmatprep.subr.bf16.mxu0 0
    %549 = vmatpush1.bf16.msra.mxu0 %v209
    %550 = vmatprep.subr.bf16.mxu0 0
    %551 = vmatpush1.bf16.msra.mxu0 0
    %552 = vmatprep.subr.bf16.mxu0 0
    %553 = vmatpush1.bf16.msra.mxu0 0
    %554 = vmatprep.subr.bf16.mxu0 0
    %555 = vmatpush1.bf16.msra.mxu0 0
    %556 = vmatprep.subr.bf16.mxu0 0
    %557 = vmatpush1.bf16.msra.mxu0 0
    %558 = vmatprep.subr.bf16.mxu0 0
    %559 = vmatpush1.bf16.msra.mxu0 0
    %560 = vmatprep.subr.bf16.mxu0 0
    %561 = vmatpush1.bf16.msra.mxu0 0
    %562 = vmatprep.subr.bf16.mxu0 0
    %563 = vmatpush1.bf16.msra.mxu0 0
    %564 = vmatprep.subr.bf16.mxu0 0
    %565 = vmatpush1.bf16.msra.mxu0 0
    %566 = vmatprep.subr.bf16.mxu0 0
    %567 = vmatpush1.bf16.msra.mxu0 0
    %568 = vmatprep.subr.bf16.mxu0 0
    %569 = vmatpush1.bf16.msra.mxu0 0
    %570 = vmatprep.subr.bf16.mxu0 0
    %571 = vmatpush1.bf16.msra.mxu0 0
    %572 = vmatprep.subr.bf16.mxu0 0
    %573 = vmatpush1.bf16.msra.mxu0 0
    %574 = vmatprep.subr.bf16.mxu0 0
    %575 = vmatpush1.bf16.msra.mxu0 0
    %576 = vmatprep.subr.bf16.mxu0 0
    %577 = vmatpush1.bf16.msra.mxu0 0
    %578 = vmatprep.mubr.bf16.mxu0 0
    %579 = vmatmul.mubr.bf16.gmra.mrb[0].mxu0 %v544
    %v580 = vpop.f32.mrb[0].mxu0
    %v581 = vadd.f32 0.0, %v580
    %v582 = vpop.f32.mrb[0].mxu0
    %v583 = vpop.f32.mrb[0].mxu0
    %v584 = vpop.f32.mrb[0].mxu0
    %585 = vdwg.mxu0
    %s586 = scalar_lea.vmem [#allocation2], 2
    %v587 = vld [vmem:[%s586] sm:$0x1]
    %v588 = vunpack.c.l.bf16 %v587
    %v589 = vadd.f32 %v588, %v581
    %s590 = scalar_lea.vmem [#allocation2], 5
    %v591 = vld [vmem:[%s590] sm:$0x1]
    %v592 = vunpack.c.l.bf16 %v591
    %v593 = vadd.f32 %v592, %v581
    %v594 = vxor.u32 %v589, 2147483648
    %v595 = vmul.f32 %v594, 1.442695
    %v596 = vpow.pop %v595
    %v597 = vadd.f32 %v596, 1.0
    %v598 = vrcp.pop %v597
    %v599 = vmul.f32 1.0, %v598
    %v600 = vtanh.pop %v589
    %v601 = vmul.f32 %v599, %v446
    %603 = vrot.lane.b32.xlu0 %v600, 96
    %v604 = vpop.permute.xlu0 %603
    %v606 = vmul.f32 %v599, %v604
    %608 = vrot.lane.b32.xlu0 %v606, 16
    %v609 = vpop.permute.xlu0 %608
    %v611 = vadd.f32 %v601, %v609
    %v612 = vtanh.pop %v611
    %614 = vrot.lane.b32.xlu0 %v612, 32
    %v615 = vpop.permute.xlu0 %614
    %v617 = vmul.f32 %v599, %v615
    %v618 = vxor.u32 %v593, 2147483648
    %v619 = vmul.f32 %v618, 1.442695
    %v620 = vpow.pop %v619
    %v621 = vadd.f32 %v620, 1.0
    %v622 = vrcp.pop %v621
    %v623 = vmul.f32 1.0, %v622
    %v624 = vtanh.pop %v593
    %v625 = vmul.f32 %v623, %v470
    %627 = vrot.lane.b32.xlu0 %v624, 96
    %v628 = vpop.permute.xlu0 %627
    %v630 = vmul.f32 %v623, %v628
    %632 = vrot.lane.b32.xlu0 %v630, 16
    %v633 = vpop.permute.xlu0 %632
    %v635 = vadd.f32 %v625, %v633
    %v636 = vtanh.pop %v635
    %638 = vrot.lane.b32.xlu0 %v636, 32
    %v639 = vpop.permute.xlu0 %638
    %v641 = vmul.f32 %v623, %v639
    %v642 = vpack.c.bf16 %v617, %v617
    %v645 = vunpack.c.l.s4 1966171168
    %v646 = vunpack.c.0.s8 %v645
    %v647 = vlaneseq
    %v648 = vshrl.u32 %v647, 7
    %v649 = vsub.s32 %v646, %v648
    %v650 = vrot.slane %v642, %v649
    %v652 = vunpack.c.l.s4 1966171168
    %v653 = vunpack.c.0.s8 %v652
    %v654 = vlaneseq
    %v655 = vshrl.u32 %v654, 7
    %v656 = vsub.s32 %v653, %v655
    %v657 = vrot.slane %v650, %v656
    %658 = vrot.lane.b32.xlu0 %v657, 80
    %v659 = vpop.permute.xlu0 %658
    %s661 = scalar_lea.vmem [#allocation9], 2
    %662 = vst.msk [vmem:[%s661] sm:$0x1] %vm329, %v659
    %v663 = vpack.c.bf16 %v641, %v641
    %v666 = vunpack.c.l.s4 1966171168
    %v667 = vunpack.c.0.s8 %v666
    %v668 = vlaneseq
    %v669 = vshrl.u32 %v668, 7
    %v670 = vsub.s32 %v667, %v669
    %v671 = vrot.slane %v663, %v670
    %v673 = vunpack.c.l.s4 1966171168
    %v674 = vunpack.c.0.s8 %v673
    %v675 = vlaneseq
    %v676 = vshrl.u32 %v675, 7
    %v677 = vsub.s32 %v674, %v676
    %v678 = vrot.slane %v671, %v677
    %679 = vrot.lane.b32.xlu0 %v678, 32
    %v680 = vpop.permute.xlu0 %679
    %s682 = scalar_lea.vmem [#allocation9], 5
    %683 = vst.msk [vmem:[%s682] sm:$0x1] %vm351, %v680
    %v686 = vunpack.c.l.s4 1983009808
    %v687 = vunpack.c.0.s8 %v686
    %v688 = vlaneseq
    %v689 = vshrl.u32 %v688, 7
    %v690 = vsub.s32 %v687, %v689
    %v691 = vrot.slane %v617, %v690
    %692 = vrot.lane.b32.xlu0 %v691, 80
    %v693 = vpop.permute.xlu0 %692
    %v697 = vunpack.c.l.s4 1983009808
    %v698 = vunpack.c.0.s8 %v697
    %v699 = vlaneseq
    %v700 = vshrl.u32 %v699, 7
    %v701 = vsub.s32 %v698, %v700
    %v702 = vrot.slane %v641, %v701
    %703 = vrot.lane.b32.xlu0 %v702, 32
    %v704 = vpop.permute.xlu0 %703
    %v706 = vsel %vm375, %v693, %v704
    %v707 = vpack.c.bf16 %v706, %v706
    %v709 = vsel %vm90, %v707, 0
    %711 = vmatprep.subr.bf16.mxu0 0
    %712 = vmatpush1.bf16.msra.mxu0 %v208
    %713 = vmatprep.subr.bf16.mxu0 0
    %714 = vmatpush1.bf16.msra.mxu0 %v209
    %715 = vmatprep.subr.bf16.mxu0 0
    %716 = vmatpush1.bf16.msra.mxu0 0
    %717 = vmatprep.subr.bf16.mxu0 0
    %718 = vmatpush1.bf16.msra.mxu0 0
    %719 = vmatprep.subr.bf16.mxu0 0
    %720 = vmatpush1.bf16.msra.mxu0 0
    %721 = vmatprep.subr.bf16.mxu0 0
    %722 = vmatpush1.bf16.msra.mxu0 0
    %723 = vmatprep.subr.bf16.mxu0 0
    %724 = vmatpush1.bf16.msra.mxu0 0
    %725 = vmatprep.subr.bf16.mxu0 0
    %726 = vmatpush1.bf16.msra.mxu0 0
    %727 = vmatprep.subr.bf16.mxu0 0
    %728 = vmatpush1.bf16.msra.mxu0 0
    %729 = vmatprep.subr.bf16.mxu0 0
    %730 = vmatpush1.bf16.msra.mxu0 0
    %731 = vmatprep.subr.bf16.mxu0 0
    %732 = vmatpush1.bf16.msra.mxu0 0
    %733 = vmatprep.subr.bf16.mxu0 0
    %734 = vmatpush1.bf16.msra.mxu0 0
    %735 = vmatprep.subr.bf16.mxu0 0
    %736 = vmatpush1.bf16.msra.mxu0 0
    %737 = vmatprep.subr.bf16.mxu0 0
    %738 = vmatpush1.bf16.msra.mxu0 0
    %739 = vmatprep.subr.bf16.mxu0 0
    %740 = vmatpush1.bf16.msra.mxu0 0
    %741 = vmatprep.subr.bf16.mxu0 0
    %742 = vmatpush1.bf16.msra.mxu0 0
    %743 = vmatprep.mubr.bf16.mxu0 0
    %744 = vmatmul.mubr.bf16.gmra.mrb[0].mxu0 %v709
    %v745 = vpop.f32.mrb[0].mxu0
    %v746 = vadd.f32 0.0, %v745
    %v747 = vpop.f32.mrb[0].mxu0
    %v748 = vpop.f32.mrb[0].mxu0
    %v749 = vpop.f32.mrb[0].mxu0
    %750 = vdwg.mxu0
    %s751 = scalar_lea.vmem [#allocation2], 3
    %v752 = vld [vmem:[%s751] sm:$0x1]
    %v753 = vunpack.c.l.bf16 %v752
    %v754 = vadd.f32 %v753, %v746
    %s755 = scalar_lea.vmem [#allocation2], 4
    %v756 = vld [vmem:[%s755] sm:$0x1]
    %v757 = vunpack.c.l.bf16 %v756
    %v758 = vadd.f32 %v757, %v746
    %v759 = vxor.u32 %v754, 2147483648
    %v760 = vmul.f32 %v759, 1.442695
    %v761 = vpow.pop %v760
    %v762 = vadd.f32 %v761, 1.0
    %v763 = vrcp.pop %v762
    %v764 = vmul.f32 1.0, %v763
    %v765 = vtanh.pop %v754
    %v766 = vmul.f32 %v764, %v611
    %768 = vrot.lane.b32.xlu0 %v765, 96
    %v769 = vpop.permute.xlu0 %768
    %v771 = vmul.f32 %v764, %v769
    %773 = vrot.lane.b32.xlu0 %v771, 16
    %v774 = vpop.permute.xlu0 %773
    %v776 = vadd.f32 %v766, %v774
    %v777 = vtanh.pop %v776
    %779 = vrot.lane.b32.xlu0 %v777, 32
    %v780 = vpop.permute.xlu0 %779
    %v782 = vmul.f32 %v764, %v780
    %v783 = vxor.u32 %v758, 2147483648
    %v784 = vmul.f32 %v783, 1.442695
    %v785 = vpow.pop %v784
    %v786 = vadd.f32 %v785, 1.0
    %v787 = vrcp.pop %v786
    %v788 = vmul.f32 1.0, %v787
    %v789 = vtanh.pop %v758
    %v790 = vmul.f32 %v788, %v635
    %792 = vrot.lane.b32.xlu0 %v789, 96
    %v793 = vpop.permute.xlu0 %792
    %v795 = vmul.f32 %v788, %v793
    %797 = vrot.lane.b32.xlu0 %v795, 16
    %v798 = vpop.permute.xlu0 %797
    %v800 = vadd.f32 %v790, %v798
    %v801 = vtanh.pop %v800
    %803 = vrot.lane.b32.xlu0 %v801, 32
    %v804 = vpop.permute.xlu0 %803
    %v806 = vmul.f32 %v788, %v804
    %v807 = vpack.c.bf16 %v782, %v782
    %v810 = vunpack.c.l.s4 1966171168
    %v811 = vunpack.c.0.s8 %v810
    %v812 = vlaneseq
    %v813 = vshrl.u32 %v812, 7
    %v814 = vsub.s32 %v811, %v813
    %v815 = vrot.slane %v807, %v814
    %v817 = vunpack.c.l.s4 1966171168
    %v818 = vunpack.c.0.s8 %v817
    %v819 = vlaneseq
    %v820 = vshrl.u32 %v819, 7
    %v821 = vsub.s32 %v818, %v820
    %v822 = vrot.slane %v815, %v821
    %823 = vrot.lane.b32.xlu0 %v822, 80
    %v824 = vpop.permute.xlu0 %823
    %s826 = scalar_lea.vmem [#allocation9], 3
    %827 = vst.msk [vmem:[%s826] sm:$0x1] %vm329, %v824
    %v828 = vpack.c.bf16 %v806, %v806
    %v831 = vunpack.c.l.s4 1966171168
    %v832 = vunpack.c.0.s8 %v831
    %v833 = vlaneseq
    %v834 = vshrl.u32 %v833, 7
    %v835 = vsub.s32 %v832, %v834
    %v836 = vrot.slane %v828, %v835
    %v838 = vunpack.c.l.s4 1966171168
    %v839 = vunpack.c.0.s8 %v838
    %v840 = vlaneseq
    %v841 = vshrl.u32 %v840, 7
    %v842 = vsub.s32 %v839, %v841
    %v843 = vrot.slane %v836, %v842
    %844 = vrot.lane.b32.xlu0 %v843, 32
    %v845 = vpop.permute.xlu0 %844
    %s847 = scalar_lea.vmem [#allocation9], 4
    %848 = vst.msk [vmem:[%s847] sm:$0x1] %vm351, %v845
    %v851 = vunpack.c.l.s4 1983009808
    %v852 = vunpack.c.0.s8 %v851
    %v853 = vlaneseq
    %v854 = vshrl.u32 %v853, 7
    %v855 = vsub.s32 %v852, %v854
    %v856 = vrot.slane %v782, %v855
    %857 = vrot.lane.b32.xlu0 %v856, 80
    %v858 = vpop.permute.xlu0 %857
    %v862 = vunpack.c.l.s4 1983009808
    %v863 = vunpack.c.0.s8 %v862
    %v864 = vlaneseq
    %v865 = vshrl.u32 %v864, 7
    %v866 = vsub.s32 %v863, %v865
    %v867 = vrot.slane %v806, %v866
    %868 = vrot.lane.b32.xlu0 %v867, 32
    %v869 = vpop.permute.xlu0 %868
    %v871 = vsel %vm375, %v858, %v869
    %v872 = vpack.c.bf16 %v871, %v871
    %v874 = vsel %vm90, %v872, 0
    %876 = vmatprep.subr.bf16.mxu0 0
    %877 = vmatpush1.bf16.msra.mxu0 %v208
    %878 = vmatprep.subr.bf16.mxu0 0
    %879 = vmatpush1.bf16.msra.mxu0 %v209
    %880 = vmatprep.subr.bf16.mxu0 0
    %881 = vmatpush1.bf16.msra.mxu0 0
    %882 = vmatprep.subr.bf16.mxu0 0
    %883 = vmatpush1.bf16.msra.mxu0 0
    %884 = vmatprep.subr.bf16.mxu0 0
    %885 = vmatpush1.bf16.msra.mxu0 0
    %886 = vmatprep.subr.bf16.mxu0 0
    %887 = vmatpush1.bf16.msra.mxu0 0
    %888 = vmatprep.subr.bf16.mxu0 0
    %889 = vmatpush1.bf16.msra.mxu0 0
    %890 = vmatprep.subr.bf16.mxu0 0
    %891 = vmatpush1.bf16.msra.mxu0 0
    %892 = vmatprep.subr.bf16.mxu0 0
    %893 = vmatpush1.bf16.msra.mxu0 0
    %894 = vmatprep.subr.bf16.mxu0 0
    %895 = vmatpush1.bf16.msra.mxu0 0
    %896 = vmatprep.subr.bf16.mxu0 0
    %897 = vmatpush1.bf16.msra.mxu0 0
    %898 = vmatprep.subr.bf16.mxu0 0
    %899 = vmatpush1.bf16.msra.mxu0 0
    %900 = vmatprep.subr.bf16.mxu0 0
    %901 = vmatpush1.bf16.msra.mxu0 0
    %902 = vmatprep.subr.bf16.mxu0 0
    %903 = vmatpush1.bf16.msra.mxu0 0
    %904 = vmatprep.subr.bf16.mxu0 0
    %905 = vmatpush1.bf16.msra.mxu0 0
    %906 = vmatprep.subr.bf16.mxu0 0
    %907 = vmatpush1.bf16.msra.mxu0 0
    %908 = vmatprep.mubr.bf16.mxu0 0
    %909 = vmatmul.mubr.bf16.gmra.mrb[0].mxu0 %v874
    %v910 = vpop.f32.mrb[0].mxu0
    %v911 = vadd.f32 0.0, %v910
    %v912 = vpop.f32.mrb[0].mxu0
    %v913 = vpop.f32.mrb[0].mxu0
    %v914 = vpop.f32.mrb[0].mxu0
    %915 = vdwg.mxu0
    %v916 = vld [vmem:[%s755] sm:$0x1]
    %v917 = vunpack.c.l.bf16 %v916
    %v918 = vadd.f32 %v917, %v911
    %v919 = vld [vmem:[%s751] sm:$0x1]
    %v920 = vunpack.c.l.bf16 %v919
    %v921 = vadd.f32 %v920, %v911
    %v922 = vxor.u32 %v918, 2147483648
    %v923 = vmul.f32 %v922, 1.442695
    %v924 = vpow.pop %v923
    %v925 = vadd.f32 %v924, 1.0
    %v926 = vrcp.pop %v925
    %v927 = vmul.f32 1.0, %v926
    %v928 = vtanh.pop %v918
    %v929 = vmul.f32 %v927, %v776
    %931 = vrot.lane.b32.xlu0 %v928, 96
    %v932 = vpop.permute.xlu0 %931
    %v934 = vmul.f32 %v927, %v932
    %936 = vrot.lane.b32.xlu0 %v934, 16
    %v937 = vpop.permute.xlu0 %936
    %v939 = vadd.f32 %v929, %v937
    %v940 = vtanh.pop %v939
    %942 = vrot.lane.b32.xlu0 %v940, 32
    %v943 = vpop.permute.xlu0 %942
    %v945 = vmul.f32 %v927, %v943
    %v946 = vxor.u32 %v921, 2147483648
    %v947 = vmul.f32 %v946, 1.442695
    %v948 = vpow.pop %v947
    %v949 = vadd.f32 %v948, 1.0
    %v950 = vrcp.pop %v949
    %v951 = vmul.f32 1.0, %v950
    %v952 = vtanh.pop %v921
    %v953 = vmul.f32 %v951, %v800
    %955 = vrot.lane.b32.xlu0 %v952, 96
    %v956 = vpop.permute.xlu0 %955
    %v958 = vmul.f32 %v951, %v956
    %960 = vrot.lane.b32.xlu0 %v958, 16
    %v961 = vpop.permute.xlu0 %960
    %v963 = vadd.f32 %v953, %v961
    %v964 = vtanh.pop %v963
    %966 = vrot.lane.b32.xlu0 %v964, 32
    %v967 = vpop.permute.xlu0 %966
    %v969 = vmul.f32 %v951, %v967
    %v970 = vpack.c.bf16 %v945, %v945
    %v973 = vunpack.c.l.s4 1966171168
    %v974 = vunpack.c.0.s8 %v973
    %v975 = vlaneseq
    %v976 = vshrl.u32 %v975, 7
    %v977 = vsub.s32 %v974, %v976
    %v978 = vrot.slane %v970, %v977
    %v980 = vunpack.c.l.s4 1966171168
    %v981 = vunpack.c.0.s8 %v980
    %v982 = vlaneseq
    %v983 = vshrl.u32 %v982, 7
    %v984 = vsub.s32 %v981, %v983
    %v985 = vrot.slane %v978, %v984
    %986 = vrot.lane.b32.xlu0 %v985, 80
    %v987 = vpop.permute.xlu0 %986
    %989 = vst.msk [vmem:[%s847] sm:$0x1] %vm329, %v987
    %v990 = vpack.c.bf16 %v969, %v969
    %v993 = vunpack.c.l.s4 1966171168
    %v994 = vunpack.c.0.s8 %v993
    %v995 = vlaneseq
    %v996 = vshrl.u32 %v995, 7
    %v997 = vsub.s32 %v994, %v996
    %v998 = vrot.slane %v990, %v997
    %v1000 = vunpack.c.l.s4 1966171168
    %v1001 = vunpack.c.0.s8 %v1000
    %v1002 = vlaneseq
    %v1003 = vshrl.u32 %v1002, 7
    %v1004 = vsub.s32 %v1001, %v1003
    %v1005 = vrot.slane %v998, %v1004
    %1006 = vrot.lane.b32.xlu0 %v1005, 32
    %v1007 = vpop.permute.xlu0 %1006
    %1009 = vst.msk [vmem:[%s826] sm:$0x1] %vm351, %v1007
    %v1012 = vunpack.c.l.s4 1983009808
    %v1013 = vunpack.c.0.s8 %v1012
    %v1014 = vlaneseq
    %v1015 = vshrl.u32 %v1014, 7
    %v1016 = vsub.s32 %v1013, %v1015
    %v1017 = vrot.slane %v945, %v1016
    %1018 = vrot.lane.b32.xlu0 %v1017, 80
    %v1019 = vpop.permute.xlu0 %1018
    %v1023 = vunpack.c.l.s4 1983009808
    %v1024 = vunpack.c.0.s8 %v1023
    %v1025 = vlaneseq
    %v1026 = vshrl.u32 %v1025, 7
    %v1027 = vsub.s32 %v1024, %v1026
    %v1028 = vrot.slane %v969, %v1027
    %1029 = vrot.lane.b32.xlu0 %v1028, 32
    %v1030 = vpop.permute.xlu0 %1029
    %v1032 = vsel %vm375, %v1019, %v1030
    %v1033 = vpack.c.bf16 %v1032, %v1032
    %v1035 = vsel %vm90, %v1033, 0
    %1037 = vmatprep.subr.bf16.mxu0 0
    %1038 = vmatpush1.bf16.msra.mxu0 %v208
    %1039 = vmatprep.subr.bf16.mxu0 0
    %1040 = vmatpush1.bf16.msra.mxu0 %v209
    %1041 = vmatprep.subr.bf16.mxu0 0
    %1042 = vmatpush1.bf16.msra.mxu0 0
    %1043 = vmatprep.subr.bf16.mxu0 0
    %1044 = vmatpush1.bf16.msra.mxu0 0
    %1045 = vmatprep.subr.bf16.mxu0 0
    %1046 = vmatpush1.bf16.msra.mxu0 0
    %1047 = vmatprep.subr.bf16.mxu0 0
    %1048 = vmatpush1.bf16.msra.mxu0 0
    %1049 = vmatprep.subr.bf16.mxu0 0
    %1050 = vmatpush1.bf16.msra.mxu0 0
    %1051 = vmatprep.subr.bf16.mxu0 0
    %1052 = vmatpush1.bf16.msra.mxu0 0
    %1053 = vmatprep.subr.bf16.mxu0 0
    %1054 = vmatpush1.bf16.msra.mxu0 0
    %1055 = vmatprep.subr.bf16.mxu0 0
    %1056 = vmatpush1.bf16.msra.mxu0 0
    %1057 = vmatprep.subr.bf16.mxu0 0
    %1058 = vmatpush1.bf16.msra.mxu0 0
    %1059 = vmatprep.subr.bf16.mxu0 0
    %1060 = vmatpush1.bf16.msra.mxu0 0
    %1061 = vmatprep.subr.bf16.mxu0 0
    %1062 = vmatpush1.bf16.msra.mxu0 0
    %1063 = vmatprep.subr.bf16.mxu0 0
    %1064 = vmatpush1.bf16.msra.mxu0 0
    %1065 = vmatprep.subr.bf16.mxu0 0
    %1066 = vmatpush1.bf16.msra.mxu0 0
    %1067 = vmatprep.subr.bf16.mxu0 0
    %1068 = vmatpush1.bf16.msra.mxu0 0
    %1069 = vmatprep.mubr.bf16.mxu0 0
    %1070 = vmatmul.mubr.bf16.gmra.mrb[0].mxu0 %v1035
    %v1071 = vpop.f32.mrb[0].mxu0
    %v1072 = vadd.f32 0.0, %v1071
    %v1073 = vpop.f32.mrb[0].mxu0
    %v1074 = vpop.f32.mrb[0].mxu0
    %v1075 = vpop.f32.mrb[0].mxu0
    %1076 = vdwg.mxu0
    %v1077 = vld [vmem:[%s590] sm:$0x1]
    %v1078 = vunpack.c.l.bf16 %v1077
    %v1079 = vadd.f32 %v1078, %v1072
    %v1080 = vld [vmem:[%s586] sm:$0x1]
    %v1081 = vunpack.c.l.bf16 %v1080
    %v1082 = vadd.f32 %v1081, %v1072
    %v1083 = vxor.u32 %v1079, 2147483648
    %v1084 = vmul.f32 %v1083, 1.442695
    %v1085 = vpow.pop %v1084
    %v1086 = vadd.f32 %v1085, 1.0
    %v1087 = vrcp.pop %v1086
    %v1088 = vmul.f32 1.0, %v1087
    %v1089 = vtanh.pop %v1079
    %v1090 = vmul.f32 %v1088, %v939
    %1092 = vrot.lane.b32.xlu0 %v1089, 96
    %v1093 = vpop.permute.xlu0 %1092
    %v1095 = vmul.f32 %v1088, %v1093
    %1097 = vrot.lane.b32.xlu0 %v1095, 16
    %v1098 = vpop.permute.xlu0 %1097
    %v1100 = vadd.f32 %v1090, %v1098
    %v1101 = vtanh.pop %v1100
    %1103 = vrot.lane.b32.xlu0 %v1101, 32
    %v1104 = vpop.permute.xlu0 %1103
    %v1106 = vmul.f32 %v1088, %v1104
    %v1107 = vxor.u32 %v1082, 2147483648
    %v1108 = vmul.f32 %v1107, 1.442695
    %v1109 = vpow.pop %v1108
    %v1110 = vadd.f32 %v1109, 1.0
    %v1111 = vrcp.pop %v1110
    %v1112 = vmul.f32 1.0, %v1111
    %v1113 = vtanh.pop %v1082
    %v1114 = vmul.f32 %v1112, %v963
    %1116 = vrot.lane.b32.xlu0 %v1113, 96
    %v1117 = vpop.permute.xlu0 %1116
    %v1119 = vmul.f32 %v1112, %v1117
    %1121 = vrot.lane.b32.xlu0 %v1119, 16
    %v1122 = vpop.permute.xlu0 %1121
    %v1124 = vadd.f32 %v1114, %v1122
    %v1125 = vtanh.pop %v1124
    %1127 = vrot.lane.b32.xlu0 %v1125, 32
    %v1128 = vpop.permute.xlu0 %1127
    %v1130 = vmul.f32 %v1112, %v1128
    %v1131 = vpack.c.bf16 %v1106, %v1106
    %v1134 = vunpack.c.l.s4 1966171168
    %v1135 = vunpack.c.0.s8 %v1134
    %v1136 = vlaneseq
    %v1137 = vshrl.u32 %v1136, 7
    %v1138 = vsub.s32 %v1135, %v1137
    %v1139 = vrot.slane %v1131, %v1138
    %v1141 = vunpack.c.l.s4 1966171168
    %v1142 = vunpack.c.0.s8 %v1141
    %v1143 = vlaneseq
    %v1144 = vshrl.u32 %v1143, 7
    %v1145 = vsub.s32 %v1142, %v1144
    %v1146 = vrot.slane %v1139, %v1145
    %1147 = vrot.lane.b32.xlu0 %v1146, 80
    %v1148 = vpop.permute.xlu0 %1147
    %1150 = vst.msk [vmem:[%s682] sm:$0x1] %vm329, %v1148
    %v1151 = vpack.c.bf16 %v1130, %v1130
    %v1154 = vunpack.c.l.s4 1966171168
    %v1155 = vunpack.c.0.s8 %v1154
    %v1156 = vlaneseq
    %v1157 = vshrl.u32 %v1156, 7
    %v1158 = vsub.s32 %v1155, %v1157
    %v1159 = vrot.slane %v1151, %v1158
    %v1161 = vunpack.c.l.s4 1966171168
    %v1162 = vunpack.c.0.s8 %v1161
    %v1163 = vlaneseq
    %v1164 = vshrl.u32 %v1163, 7
    %v1165 = vsub.s32 %v1162, %v1164
    %v1166 = vrot.slane %v1159, %v1165
    %1167 = vrot.lane.b32.xlu0 %v1166, 32
    %v1168 = vpop.permute.xlu0 %1167
    %1170 = vst.msk [vmem:[%s661] sm:$0x1] %vm351, %v1168
    %v1173 = vunpack.c.l.s4 1983009808
    %v1174 = vunpack.c.0.s8 %v1173
    %v1175 = vlaneseq
    %v1176 = vshrl.u32 %v1175, 7
    %v1177 = vsub.s32 %v1174, %v1176
    %v1178 = vrot.slane %v1106, %v1177
    %1179 = vrot.lane.b32.xlu0 %v1178, 80
    %v1180 = vpop.permute.xlu0 %1179
    %v1184 = vunpack.c.l.s4 1983009808
    %v1185 = vunpack.c.0.s8 %v1184
    %v1186 = vlaneseq
    %v1187 = vshrl.u32 %v1186, 7
    %v1188 = vsub.s32 %v1185, %v1187
    %v1189 = vrot.slane %v1130, %v1188
    %1190 = vrot.lane.b32.xlu0 %v1189, 32
    %v1191 = vpop.permute.xlu0 %1190
    %v1193 = vsel %vm375, %v1180, %v1191
    %v1194 = vpack.c.bf16 %v1193, %v1193
    %v1196 = vsel %vm90, %v1194, 0
    %1198 = vmatprep.subr.bf16.mxu0 0
    %1199 = vmatpush1.bf16.msra.mxu0 %v208
    %1200 = vmatprep.subr.bf16.mxu0 0
    %1201 = vmatpush1.bf16.msra.mxu0 %v209
    %1202 = vmatprep.subr.bf16.mxu0 0
    %1203 = vmatpush1.bf16.msra.mxu0 0
    %1204 = vmatprep.subr.bf16.mxu0 0
    %1205 = vmatpush1.bf16.msra.mxu0 0
    %1206 = vmatprep.subr.bf16.mxu0 0
    %1207 = vmatpush1.bf16.msra.mxu0 0
    %1208 = vmatprep.subr.bf16.mxu0 0
    %1209 = vmatpush1.bf16.msra.mxu0 0
    %1210 = vmatprep.subr.bf16.mxu0 0
    %1211 = vmatpush1.bf16.msra.mxu0 0
    %1212 = vmatprep.subr.bf16.mxu0 0
    %1213 = vmatpush1.bf16.msra.mxu0 0
    %1214 = vmatprep.subr.bf16.mxu0 0
    %1215 = vmatpush1.bf16.msra.mxu0 0
    %1216 = vmatprep.subr.bf16.mxu0 0
    %1217 = vmatpush1.bf16.msra.mxu0 0
    %1218 = vmatprep.subr.bf16.mxu0 0
    %1219 = vmatpush1.bf16.msra.mxu0 0
    %1220 = vmatprep.subr.bf16.mxu0 0
    %1221 = vmatpush1.bf16.msra.mxu0 0
    %1222 = vmatprep.subr.bf16.mxu0 0
    %1223 = vmatpush1.bf16.msra.mxu0 0
    %1224 = vmatprep.subr.bf16.mxu0 0
    %1225 = vmatpush1.bf16.msra.mxu0 0
    %1226 = vmatprep.subr.bf16.mxu0 0
    %1227 = vmatpush1.bf16.msra.mxu0 0
    %1228 = vmatprep.subr.bf16.mxu0 0
    %1229 = vmatpush1.bf16.msra.mxu0 0
    %1230 = vmatprep.mubr.bf16.mxu0 0
    %1231 = vmatmul.mubr.bf16.gmra.mrb[0].mxu0 %v1196
    %v1232 = vpop.f32.mrb[0].mxu0
    %v1233 = vadd.f32 0.0, %v1232
    %v1234 = vpop.f32.mrb[0].mxu0
    %v1235 = vpop.f32.mrb[0].mxu0
    %v1236 = vpop.f32.mrb[0].mxu0
    %1237 = vdwg.mxu0
    %v1238 = vld [vmem:[%s425] sm:$0x1]
    %v1239 = vunpack.c.l.bf16 %v1238
    %v1240 = vadd.f32 %v1239, %v1233
    %v1241 = vld [vmem:[%s421] sm:$0x1]
    %v1242 = vunpack.c.l.bf16 %v1241
    %v1243 = vadd.f32 %v1242, %v1233
    %v1244 = vxor.u32 %v1240, 2147483648
    %v1245 = vmul.f32 %v1244, 1.442695
    %v1246 = vpow.pop %v1245
    %v1247 = vadd.f32 %v1246, 1.0
    %v1248 = vrcp.pop %v1247
    %v1249 = vmul.f32 1.0, %v1248
    %v1250 = vtanh.pop %v1240
    %v1251 = vmul.f32 %v1249, %v1100
    %1253 = vrot.lane.b32.xlu0 %v1250, 96
    %v1254 = vpop.permute.xlu0 %1253
    %v1256 = vmul.f32 %v1249, %v1254
    %1258 = vrot.lane.b32.xlu0 %v1256, 16
    %v1259 = vpop.permute.xlu0 %1258
    %v1261 = vadd.f32 %v1251, %v1259
    %v1262 = vtanh.pop %v1261
    %1264 = vrot.lane.b32.xlu0 %v1262, 32
    %v1265 = vpop.permute.xlu0 %1264
    %v1267 = vmul.f32 %v1249, %v1265
    %v1268 = vxor.u32 %v1243, 2147483648
    %v1269 = vmul.f32 %v1268, 1.442695
    %v1270 = vpow.pop %v1269
    %v1271 = vadd.f32 %v1270, 1.0
    %v1272 = vrcp.pop %v1271
    %v1273 = vmul.f32 1.0, %v1272
    %v1274 = vtanh.pop %v1243
    %v1275 = vmul.f32 %v1273, %v1124
    %1277 = vrot.lane.b32.xlu0 %v1274, 96
    %v1278 = vpop.permute.xlu0 %1277
    %v1280 = vmul.f32 %v1273, %v1278
    %1282 = vrot.lane.b32.xlu0 %v1280, 16
    %v1283 = vpop.permute.xlu0 %1282
    %v1285 = vadd.f32 %v1275, %v1283
    %v1286 = vtanh.pop %v1285
    %1288 = vrot.lane.b32.xlu0 %v1286, 32
    %v1289 = vpop.permute.xlu0 %1288
    %v1291 = vmul.f32 %v1273, %v1289
    %v1292 = vpack.c.bf16 %v1267, %v1267
    %v1295 = vunpack.c.l.s4 1966171168
    %v1296 = vunpack.c.0.s8 %v1295
    %v1297 = vlaneseq
    %v1298 = vshrl.u32 %v1297, 7
    %v1299 = vsub.s32 %v1296, %v1298
    %v1300 = vrot.slane %v1292, %v1299
    %v1302 = vunpack.c.l.s4 1966171168
    %v1303 = vunpack.c.0.s8 %v1302
    %v1304 = vlaneseq
    %v1305 = vshrl.u32 %v1304, 7
    %v1306 = vsub.s32 %v1303, %v1305
    %v1307 = vrot.slane %v1300, %v1306
    %1308 = vrot.lane.b32.xlu0 %v1307, 80
    %v1309 = vpop.permute.xlu0 %1308
    %1311 = vst.msk [vmem:[%s517] sm:$0x1] %vm329, %v1309
    %v1312 = vpack.c.bf16 %v1291, %v1291
    %v1315 = vunpack.c.l.s4 1966171168
    %v1316 = vunpack.c.0.s8 %v1315
    %v1317 = vlaneseq
    %v1318 = vshrl.u32 %v1317, 7
    %v1319 = vsub.s32 %v1316, %v1318
    %v1320 = vrot.slane %v1312, %v1319
    %v1322 = vunpack.c.l.s4 1966171168
    %v1323 = vunpack.c.0.s8 %v1322
    %v1324 = vlaneseq
    %v1325 = vshrl.u32 %v1324, 7
    %v1326 = vsub.s32 %v1323, %v1325
    %v1327 = vrot.slane %v1320, %v1326
    %1328 = vrot.lane.b32.xlu0 %v1327, 32
    %v1329 = vpop.permute.xlu0 %1328
    %1331 = vst.msk [vmem:[%s496] sm:$0x1] %vm351, %v1329
    %v1334 = vunpack.c.l.s4 1983009808
    %v1335 = vunpack.c.0.s8 %v1334
    %v1336 = vlaneseq
    %v1337 = vshrl.u32 %v1336, 7
    %v1338 = vsub.s32 %v1335, %v1337
    %v1339 = vrot.slane %v1267, %v1338
    %1340 = vrot.lane.b32.xlu0 %v1339, 80
    %v1341 = vpop.permute.xlu0 %1340
    %v1345 = vunpack.c.l.s4 1983009808
    %v1346 = vunpack.c.0.s8 %v1345
    %v1347 = vlaneseq
    %v1348 = vshrl.u32 %v1347, 7
    %v1349 = vsub.s32 %v1346, %v1348
    %v1350 = vrot.slane %v1291, %v1349
    %1351 = vrot.lane.b32.xlu0 %v1350, 32
    %v1352 = vpop.permute.xlu0 %1351
    %v1354 = vsel %vm375, %v1341, %v1352
    %v1355 = vpack.c.bf16 %v1354, %v1354
    %v1357 = vsel %vm90, %v1355, 0
    %1359 = vmatprep.subr.bf16.mxu0 0
    %1360 = vmatpush1.bf16.msra.mxu0 %v208
    %1361 = vmatprep.subr.bf16.mxu0 0
    %1362 = vmatpush1.bf16.msra.mxu0 %v209
    %1363 = vmatprep.subr.bf16.mxu0 0
    %1364 = vmatpush1.bf16.msra.mxu0 0
    %1365 = vmatprep.subr.bf16.mxu0 0
    %1366 = vmatpush1.bf16.msra.mxu0 0
    %1367 = vmatprep.subr.bf16.mxu0 0
    %1368 = vmatpush1.bf16.msra.mxu0 0
    %1369 = vmatprep.subr.bf16.mxu0 0
    %1370 = vmatpush1.bf16.msra.mxu0 0
    %1371 = vmatprep.subr.bf16.mxu0 0
    %1372 = vmatpush1.bf16.msra.mxu0 0
    %1373 = vmatprep.subr.bf16.mxu0 0
    %1374 = vmatpush1.bf16.msra.mxu0 0
    %1375 = vmatprep.subr.bf16.mxu0 0
    %1376 = vmatpush1.bf16.msra.mxu0 0
    %1377 = vmatprep.subr.bf16.mxu0 0
    %1378 = vmatpush1.bf16.msra.mxu0 0
    %1379 = vmatprep.subr.bf16.mxu0 0
    %1380 = vmatpush1.bf16.msra.mxu0 0
    %1381 = vmatprep.subr.bf16.mxu0 0
    %1382 = vmatpush1.bf16.msra.mxu0 0
    %1383 = vmatprep.subr.bf16.mxu0 0
    %1384 = vmatpush1.bf16.msra.mxu0 0
    %1385 = vmatprep.subr.bf16.mxu0 0
    %1386 = vmatpush1.bf16.msra.mxu0 0
    %1387 = vmatprep.subr.bf16.mxu0 0
    %1388 = vmatpush1.bf16.msra.mxu0 0
    %1389 = vmatprep.subr.bf16.mxu0 0
    %1390 = vmatpush1.bf16.msra.mxu0 0
    %1391 = vmatprep.mubr.bf16.mxu0 0
    %1392 = vmatmul.mubr.bf16.gmra.mrb[0].mxu0 %v1357
    %v1393 = vpop.f32.mrb[0].mxu0
    %v1394 = vadd.f32 0.0, %v1393
    %v1395 = vpop.f32.mrb[0].mxu0
    %v1396 = vpop.f32.mrb[0].mxu0
    %v1397 = vpop.f32.mrb[0].mxu0
    %1398 = vdwg.mxu0
    %v1399 = vld [vmem:[%s258] sm:$0x1]
    %v1400 = vunpack.c.l.bf16 %v1399
    %v1401 = vadd.f32 %v1400, %v1394
    %v1402 = vld [vmem:[#allocation2] sm:$0x1]
    %v1403 = vunpack.c.l.bf16 %v1402
    %v1404 = vadd.f32 %v1403, %v1394
    %v1405 = vxor.u32 %v1401, 2147483648
    %v1406 = vmul.f32 %v1405, 1.442695
    %v1407 = vpow.pop %v1406
    %v1408 = vadd.f32 %v1407, 1.0
    %v1409 = vrcp.pop %v1408
    %v1410 = vmul.f32 1.0, %v1409
    %v1411 = vtanh.pop %v1401
    %v1412 = vmul.f32 %v1410, %v1261
    %1414 = vrot.lane.b32.xlu0 %v1411, 96
    %v1415 = vpop.permute.xlu0 %1414
    %v1417 = vmul.f32 %v1410, %v1415
    %1419 = vrot.lane.b32.xlu0 %v1417, 16
    %v1420 = vpop.permute.xlu0 %1419
    %v1422 = vadd.f32 %v1412, %v1420
    %v1423 = vtanh.pop %v1422
    %1425 = vrot.lane.b32.xlu0 %v1423, 32
    %v1426 = vpop.permute.xlu0 %1425
    %v1428 = vmul.f32 %v1410, %v1426
    %v1429 = vxor.u32 %v1404, 2147483648
    %v1430 = vmul.f32 %v1429, 1.442695
    %v1431 = vpow.pop %v1430
    %v1432 = vadd.f32 %v1431, 1.0
    %v1433 = vrcp.pop %v1432
    %v1434 = vmul.f32 1.0, %v1433
    %v1435 = vtanh.pop %v1404
    %v1436 = vmul.f32 %v1434, %v1285
    %1438 = vrot.lane.b32.xlu0 %v1435, 96
    %v1439 = vpop.permute.xlu0 %1438
    %v1441 = vmul.f32 %v1434, %v1439
    %1443 = vrot.lane.b32.xlu0 %v1441, 16
    %v1444 = vpop.permute.xlu0 %1443
    %v1446 = vadd.f32 %v1436, %v1444
    %v1447 = vtanh.pop %v1446
    %1449 = vrot.lane.b32.xlu0 %v1447, 32
    %v1450 = vpop.permute.xlu0 %1449
    %v1452 = vmul.f32 %v1434, %v1450
    %v1453 = vpack.c.bf16 %v1428, %v1428
    %v1456 = vunpack.c.l.s4 1966171168
    %v1457 = vunpack.c.0.s8 %v1456
    %v1458 = vlaneseq
    %v1459 = vshrl.u32 %v1458, 7
    %v1460 = vsub.s32 %v1457, %v1459
    %v1461 = vrot.slane %v1453, %v1460
    %v1463 = vunpack.c.l.s4 1966171168
    %v1464 = vunpack.c.0.s8 %v1463
    %v1465 = vlaneseq
    %v1466 = vshrl.u32 %v1465, 7
    %v1467 = vsub.s32 %v1464, %v1466
    %v1468 = vrot.slane %v1461, %v1467
    %1469 = vrot.lane.b32.xlu0 %v1468, 80
    %v1470 = vpop.permute.xlu0 %1469
    %1472 = vst.msk [vmem:[%s350] sm:$0x1] %vm329, %v1470
    %v1473 = vpack.c.bf16 %v1452, %v1452
    %v1476 = vunpack.c.l.s4 1966171168
    %v1477 = vunpack.c.0.s8 %v1476
    %v1478 = vlaneseq
    %v1479 = vshrl.u32 %v1478, 7
    %v1480 = vsub.s32 %v1477, %v1479
    %v1481 = vrot.slane %v1473, %v1480
    %v1483 = vunpack.c.l.s4 1966171168
    %v1484 = vunpack.c.0.s8 %v1483
    %v1485 = vlaneseq
    %v1486 = vshrl.u32 %v1485, 7
    %v1487 = vsub.s32 %v1484, %v1486
    %v1488 = vrot.slane %v1481, %v1487
    %1489 = vrot.lane.b32.xlu0 %v1488, 32
    %v1490 = vpop.permute.xlu0 %1489
    %1492 = vst.msk [vmem:[#allocation9] sm:$0x1] %vm351, %v1490
    // Predicated region
    $region30: #{tpu_custom_call.1} parent=1 // pred_check
      _
    $region31: #{tpu_custom_call.1} parent=1 // pred_check_branch
      %1494 = sbr.rel (0) target = $region33
    $region32: #{tpu_custom_call.1} parent=1 // pred_region
      %s1496 = ssub.s32 128, 128
      %1497 = vsyncadd [#allocation5], %s1496
      %s1498 = sshll.u32 [#allocation9], 4
      %s1499 = int_to_ptr.vmem [resolvable:$true] %s1498
      %1504 = dma.vmem_to_hbm [thread:$0]  %s1499, 128, %s4, [#allocation5], 16, 16, 1
    $region33: #{tpu_custom_call.1} parent=1 // pred_fallthru
      _
    // Predicated region
    $region34: #{tpu_custom_call.1} parent=1 // pred_check
      _
    $region35: #{tpu_custom_call.1} parent=1 // pred_check_branch
      %1506 = sbr.rel (0) target = $region37
    $region36: #{tpu_custom_call.1} parent=1 // pred_region
      %1507 = dma.done [#allocation5], 128
    $region37: #{tpu_custom_call.1} parent=1 // pred_fallthru
      _
    %1508 = vsyncpa [#allocation4], 1
    %1509 = vsyncpa [#allocation7], 1
    %1510 = vsyncpa [#allocation5], 1

</llo_original>
